<compile_context>
chip_gen: v5e
topology: v5e:2x2
jax: 0.10.0
libtpu: 0.0.40
codegen_flags: <defaults>
</compile_context>

<pallas_src>
import functools

import jax
import jax.numpy as jnp
from jax.experimental import pallas as pl
from jax.experimental.pallas import tpu as pltpu


def _round_up(x, m):
    return ((x + m - 1) // m) * m


# ----------------------------------------------------------------------------
# Kernel bodies
# ----------------------------------------------------------------------------

def _lstm_stack_step(x, w_refs, h_st, c_st, n_layers, clamp_state):
    """All LSTM layers for one timestep.

    x:(B,E or H)  w_refs: [wih,whh,b] * n_layers  h_st/c_st: VMEM scratch (NL,B,H).
    Updates h_st / c_st in place and returns the pre-clamp top-layer output.
    Gate order is (i, f, g, o), matching nn.LSTM.
    """
    for l in range(n_layers):
        wih_ref, whh_ref, b_ref = w_refs[3 * l], w_refs[3 * l + 1], w_refs[3 * l + 2]
        h_prev = h_st[l]                                   # (B, H)
        c_prev = c_st[l]
        H = h_prev.shape[-1]
        gates = (jnp.dot(x, wih_ref[...], preferred_element_type=jnp.float32)
                 + jnp.dot(h_prev, whh_ref[...], preferred_element_type=jnp.float32)
                 + b_ref[...])                             # (B, 4H) -> full 128-lane vreg
        # Apply the nonlinearities on the full-width vreg, then take lane slices.
        sg = jax.nn.sigmoid(gates)
        tg = jnp.tanh(gates)
        i_g = sg[:, 0 * H:1 * H]
        f_g = sg[:, 1 * H:2 * H]
        g_g = tg[:, 2 * H:3 * H]
        o_g = sg[:, 3 * H:4 * H]
        c_new = f_g * c_prev + i_g * g_g
        h_new = o_g * jnp.tanh(c_new)
        if clamp_state:
            # decoder: carried state is clamped (torch.clamp after the LSTM call),
            # but the value fed to the next layer / attention is the pre-clamp output.
            h_st[l] = jnp.clip(h_new, -50.0, 50.0)
            c_st[l] = jnp.clip(c_new, -50.0, 50.0)
        else:
            h_st[l] = h_new
            c_st[l] = c_new
        x = h_new
    return x


def _make_encoder_kernel(n_layers):
    def kernel(*refs):
        x_ref = refs[0]                                    # (B, E) current timestep
        w_refs = refs[1:1 + 3 * n_layers]                  # resident LSTM weights
        enc_out_ref, enc_h_ref, enc_c_ref = refs[1 + 3 * n_layers:4 + 3 * n_layers]
        h_st, c_st = refs[4 + 3 * n_layers:]               # VMEM scratch (NL, B, H)
        t = pl.program_id(0)

        @pl.when(t == 0)
        def _init():
            h_st[...] = jnp.zeros_like(h_st)
            c_st[...] = jnp.zeros_like(c_st)

        top = _lstm_stack_step(x_ref[...], w_refs, h_st, c_st, n_layers,
                               clamp_state=False)
        enc_out_ref[...] = top                             # streamed per-step output

        @pl.when(t == pl.num_programs(0) - 1)
        def _finalize():
            enc_h_ref[...] = jnp.clip(h_st[...], -50.0, 50.0)
            enc_c_ref[...] = jnp.clip(c_st[...], -50.0, 50.0)

    return kernel


def _make_decoder_kernel(n_layers):
    def kernel(*refs):
        emb_ref, enc_ref, h0_ref, c0_ref = refs[:4]
        rest = refs[4:]
        w_refs = rest[:3 * n_layers]
        (wg_ref, bg_ref, wod_ref, woa_ref, bo_ref,
         wout_ref, bout_ref) = rest[3 * n_layers:3 * n_layers + 7]
        logits_ref, hfin_ref = rest[3 * n_layers + 7:3 * n_layers + 9]
        h_st, c_st = rest[3 * n_layers + 9:]

        t = pl.program_id(0)

        @pl.when(t == 0)
        def _init():
            h_st[...] = h0_ref[...]                        # clamped encoder state
            c_st[...] = c0_ref[...]

        top = _lstm_stack_step(emb_ref[...], w_refs, h_st, c_st, n_layers,
                               clamp_state=True)           # (B, H), pre-clamp top output

        # --- global attention over the VMEM-resident encoder outputs -------------
        scores = (jnp.dot(top, wg_ref[...], preferred_element_type=jnp.float32)
                  + bg_ref[...])                            # (B, L)
        scores = scores - jnp.max(scores, axis=-1, keepdims=True)
        exp_s = jnp.exp(scores)
        probs = exp_s / jnp.sum(exp_s, axis=-1, keepdims=True)
        # Batched contraction over the sequence axis -> MXU (instead of VPU bcast + XLU sum).
        ctx = jnp.einsum("bql,blh->bqh", probs[:, None, :], enc_ref[...],
                         preferred_element_type=jnp.float32)        # (B, 1, H)
        attn_vec = ctx[:, 0, :]                                       # (B, H)

        att = jnp.tanh(jnp.dot(top, wod_ref[...], preferred_element_type=jnp.float32)
                       + jnp.dot(attn_vec, woa_ref[...], preferred_element_type=jnp.float32)
                       + bo_ref[...])                                 # (B, H)
        logits_ref[...] = (jnp.dot(att, wout_ref[...], preferred_element_type=jnp.float32)
                           + bout_ref[...])                           # (B, V)

        @pl.when(t == pl.num_programs(0) - 1)
        def _finalize():
            hfin_ref[...] = h_st[...]                      # already clamped

    return kernel


# ----------------------------------------------------------------------------
# Wrappers (one pallas_call per phase)
# ----------------------------------------------------------------------------

def encoder_forward(enc_emb, enc_lstm, tokens, *, n_layers):
    B, L = tokens.shape
    Bp = _round_up(B, 8)                                   # fill sublanes
    H = enc_lstm[0][1].shape[0]
    emb = enc_emb[tokens]                                  # (B, L, E) gather outside kernel
    emb = jnp.pad(emb, ((0, Bp - B), (0, 0), (0, 0)))
    x_seq = jnp.transpose(emb, (1, 0, 2))                  # (L, Bp, E) time-major
    E = x_seq.shape[-1]

    weight_args, weight_specs = [], []
    for l in range(n_layers):
        wih, whh, b = enc_lstm[l]
        weight_args += [wih, whh, b]
        weight_specs += [pl.BlockSpec(wih.shape, lambda t: (0, 0)),   # resident in VMEM
                         pl.BlockSpec(whh.shape, lambda t: (0, 0)),
                         pl.BlockSpec(b.shape, lambda t: (0, 0))]

    enc_out_tm, enc_h, enc_c = pl.pallas_call(
        _make_encoder_kernel(n_layers),
        grid=(L,),
        in_specs=[pl.BlockSpec((None, Bp, E), lambda t: (t, 0, 0))] + weight_specs,
        out_specs=(pl.BlockSpec((None, Bp, H), lambda t: (t, 0, 0)),
                   pl.BlockSpec((n_layers, Bp, H), lambda t: (0, 0, 0)),
                   pl.BlockSpec((n_layers, Bp, H), lambda t: (0, 0, 0))),
        out_shape=(jax.ShapeDtypeStruct((L, Bp, H), jnp.float32),
                   jax.ShapeDtypeStruct((n_layers, Bp, H), jnp.float32),
                   jax.ShapeDtypeStruct((n_layers, Bp, H), jnp.float32)),
        scratch_shapes=[pltpu.VMEM((n_layers, Bp, H), jnp.float32),   # h state
                        pltpu.VMEM((n_layers, Bp, H), jnp.float32)],  # c state
        compiler_params=pltpu.CompilerParams(dimension_semantics=("arbitrary",)),
    )(x_seq, *weight_args)

    enc_out = jnp.transpose(enc_out_tm, (1, 0, 2))         # (Bp, L, H) batch_first
    return enc_out, enc_h, enc_c


def decoder_forward(dec_emb, dec_lstm, attn_params, out_params,
                    enc_out, enc_h, enc_c, target, *, max_len, n_layers):
    _, Bp, H = enc_h.shape
    B = target.shape[0]
    T = max_len + 1
    E = dec_emb.shape[1]
    wg, bg, wod, woa, bo = attn_params
    wout, bout = out_params
    V = wout.shape[1]

    # teacher forcing (ratio == 1): inputs are [SOS, target[:, 0], ..., target[:, max_len-1]]
    sos = jnp.zeros((B, 1), jnp.int32)                     # SOS_token == 0
    dec_tokens = jnp.concatenate([sos, target[:, :max_len]], axis=1)   # (B, T)
    emb = dec_emb[dec_tokens]                              # (B, T, E) gathered once
    emb = jnp.pad(emb, ((0, Bp - B), (0, 0), (0, 0)))
    emb_seq = jnp.transpose(emb, (1, 0, 2))                # (T, Bp, E)

    const2 = lambda t: (0, 0)
    const3 = lambda t: (0, 0, 0)

    weight_args, weight_specs = [], []
    for l in range(n_layers):
        wih, whh, b = dec_lstm[l]
        weight_args += [wih, whh, b]
        weight_specs += [pl.BlockSpec(wih.shape, const2),
                         pl.BlockSpec(whh.shape, const2),
                         pl.BlockSpec(b.shape, const2)]

    in_specs = ([pl.BlockSpec((None, Bp, E), lambda t: (t, 0, 0)),   # per-step embedding
                 pl.BlockSpec(enc_out.shape, const3),                # enc_out resident
                 pl.BlockSpec((n_layers, Bp, H), const3),            # initial h
                 pl.BlockSpec((n_layers, Bp, H), const3)]            # initial c
                + weight_specs
                + [pl.BlockSpec(wg.shape, const2), pl.BlockSpec(bg.shape, const2),
                   pl.BlockSpec(wod.shape, const2), pl.BlockSpec(woa.shape, const2),
                   pl.BlockSpec(bo.shape, const2),
                   pl.BlockSpec(wout.shape, const2), pl.BlockSpec(bout.shape, const2)])

    logits_tm, h_final = pl.pallas_call(
        _make_decoder_kernel(n_layers),
        grid=(T,),
        in_specs=in_specs,
        out_specs=(pl.BlockSpec((None, Bp, V), lambda t: (t, 0, 0)),
                   pl.BlockSpec((n_layers, Bp, H), const3)),
        out_shape=(jax.ShapeDtypeStruct((T, Bp, V), jnp.float32),
                   jax.ShapeDtypeStruct((n_layers, Bp, H), jnp.float32)),
        scratch_shapes=[pltpu.VMEM((n_layers, Bp, H), jnp.float32),
                        pltpu.VMEM((n_layers, Bp, H), jnp.float32)],
        compiler_params=pltpu.CompilerParams(dimension_semantics=("arbitrary",)),
    )(emb_seq, enc_out, enc_h, enc_c, *weight_args, wg, bg, wod, woa, bo, wout, bout)

    decoder_outputs = jnp.transpose(logits_tm[:, :B, :], (1, 0, 2))  # (B, T, V)
    dec_hidden = h_final[:, :B, :]
    return decoder_outputs, dec_hidden


@functools.partial(jax.jit, static_argnames=("n_layers", "max_len"))
def seq2seq_forward(params, input_tensor, output_tensor, *, n_layers, max_len):
    enc_out, enc_h, enc_c = encoder_forward(
        params["enc_emb"], params["enc_lstm"], input_tensor, n_layers=n_layers)
    dec_outputs, dec_hidden = decoder_forward(
        params["dec_emb"], params["dec_lstm"], params["attn"], params["out"],
        enc_out, enc_h, enc_c, output_tensor, max_len=max_len, n_layers=n_layers)
    return dec_outputs, dec_hidden


# ----------------------------------------------------------------------------
# Deterministic synthetic parameters (mirrors the module's shapes / init)
# ----------------------------------------------------------------------------

def _uniform(key, shape, lo=-0.1, hi=0.1):
    return jax.random.uniform(key, shape, jnp.float32, lo, hi)


def init_params(key, *, src_vocab, ref_vocab, emb, hidden, n_layers, max_len):
    keys = iter(jax.random.split(key, 8 + 6 * n_layers))
    H4 = 4 * hidden

    enc_emb = _uniform(next(keys), (src_vocab, emb))
    dec_emb = _uniform(next(keys), (ref_vocab, emb))

    enc_lstm, dec_lstm = [], []
    for l in range(n_layers):
        in_dim = emb if l == 0 else hidden
        # encoder.initialization(): weights U(-0.1, 0.1), biases 0
        enc_lstm.append((_uniform(next(keys), (in_dim, H4)),
                         _uniform(next(keys), (hidden, H4)),
                         jnp.zeros((1, H4), jnp.float32)))
        # decoder LSTM keeps default init -> synthetic deterministic uniform (fused bias)
        dec_lstm.append((_uniform(next(keys), (in_dim, H4)),
                         _uniform(next(keys), (hidden, H4)),
                         _uniform(next(keys), (1, H4))))

    # Attention: global_linear (H -> max_len), out_linear (2H -> H) split into (wod | woa)
    wg = _uniform(next(keys), (hidden, max_len))
    bg = jnp.zeros((1, max_len), jnp.float32)
    wod = _uniform(next(keys), (hidden, hidden))
    woa = _uniform(next(keys), (hidden, hidden))
    bo = jnp.zeros((1, hidden), jnp.float32)

    # decoder.out: Linear(H -> ref_vocab), weight U(-0.1,0.1), bias 0
    wout = _uniform(next(keys), (hidden, ref_vocab))
    bout = jnp.zeros((1, ref_vocab), jnp.float32)

    return {"enc_emb": enc_emb, "dec_emb": dec_emb,
            "enc_lstm": enc_lstm, "dec_lstm": dec_lstm,
            "attn": (wg, bg, wod, woa, bo), "out": (wout, bout)}


# ----------------------------------------------------------------------------
# Driver
# ----------------------------------------------------------------------------

if __name__ == "__main__":
    B = 2            # batch (padded to 8 inside the wrappers)
    L = 8            # source sequence length (== max_len for global attention)
    MAX_LEN = 8
    E = 16           # embedding size
    H = 32           # hidden size (4H = 128 -> full-lane gate matmuls)
    V_SRC = 32       # source vocab
    V_REF = 32       # target vocab
    NL = 2           # LSTM layers (module default is 4; kept small for the demo)

    root = jax.random.PRNGKey(0)
    kp, kx, ky = jax.random.split(root, 3)

    params = init_params(kp, src_vocab=V_SRC, ref_vocab=V_REF, emb=E,
                         hidden=H, n_layers=NL, max_len=MAX_LEN)

    input_tensor = jax.random.randint(kx, (B, L), 0, V_SRC, dtype=jnp.int32)
    output_tensor = jax.random.randint(ky, (B, MAX_LEN + 1), 0, V_REF, dtype=jnp.int32)

    dec_outputs, dec_hidden = seq2seq_forward(
        params, input_tensor, output_tensor, n_layers=NL, max_len=MAX_LEN)
    jax.block_until_ready((dec_outputs, dec_hidden))

    assert dec_outputs.shape == (B, MAX_LEN + 1, V_REF)
    assert dec_hidden.shape == (NL, B, H)
    assert bool(jnp.all(jnp.isfinite(dec_outputs)))
    assert bool(jnp.all(jnp.isfinite(dec_hidden)))
    print("KERNEL_OK")
</pallas_src>

<mosaic_0001>
module attributes {stable_mosaic.version = 11 : i64} {
  func.func @kernel(%arg0: i32, %arg1: memref<1x8x16xf32, #tpu.memory_space<vmem>>, %arg2: memref<16x128xf32, #tpu.memory_space<vmem>>, %arg3: memref<32x128xf32, #tpu.memory_space<vmem>>, %arg4: memref<1x128xf32, #tpu.memory_space<vmem>>, %arg5: memref<32x128xf32, #tpu.memory_space<vmem>>, %arg6: memref<32x128xf32, #tpu.memory_space<vmem>>, %arg7: memref<1x128xf32, #tpu.memory_space<vmem>>, %arg8: memref<1x8x32xf32, #tpu.memory_space<vmem>>, %arg9: memref<2x8x32xf32, #tpu.memory_space<vmem>>, %arg10: memref<2x8x32xf32, #tpu.memory_space<vmem>>, %arg11: memref<2x8x32xf32, #tpu.memory_space<vmem>>, %arg12: memref<2x8x32xf32, #tpu.memory_space<vmem>>) attributes {dimension_semantics = [#tpu.dimension_semantics<arbitrary>], iteration_bounds = array<i64: 8>, scalar_prefetch = 0 : i64, scratch_operands = 2 : i64, tpu.core_type = #tpu.core_type<tc>, window_params = [{transform_indices = @transform_0, window_bounds = array<i64: 1, 8, 16>}, {pipeline_mode = #tpu.pipeline_mode<synchronous>, transform_indices = @transform_1, window_bounds = array<i64: 16, 128>}, {pipeline_mode = #tpu.pipeline_mode<synchronous>, transform_indices = @transform_2, window_bounds = array<i64: 32, 128>}, {pipeline_mode = #tpu.pipeline_mode<synchronous>, transform_indices = @transform_3, window_bounds = array<i64: 1, 128>}, {pipeline_mode = #tpu.pipeline_mode<synchronous>, transform_indices = @transform_4, window_bounds = array<i64: 32, 128>}, {pipeline_mode = #tpu.pipeline_mode<synchronous>, transform_indices = @transform_5, window_bounds = array<i64: 32, 128>}, {pipeline_mode = #tpu.pipeline_mode<synchronous>, transform_indices = @transform_6, window_bounds = array<i64: 1, 128>}, {transform_indices = @transform_7, window_bounds = array<i64: 1, 8, 32>}, {pipeline_mode = #tpu.pipeline_mode<synchronous>, transform_indices = @transform_8, window_bounds = array<i64: 2, 8, 32>}, {pipeline_mode = #tpu.pipeline_mode<synchronous>, transform_indices = @transform_9, window_bounds = array<i64: 2, 8, 32>}]} {
    %c0_i32 = arith.constant 0 : i32
    %0 = arith.cmpi eq, %arg0, %c0_i32 : i32
    %1 = arith.extui %0 : i1 to i32
    %c0_i32_0 = arith.constant 0 : i32
    %2 = arith.cmpi ne, %1, %c0_i32_0 : i32
    scf.if %2 {
      %cst_47 = arith.constant 0.000000e+00 : f32
      %77 = vector.broadcast %cst_47 : f32 to vector<2x8x32xf32>
      %c0_48 = arith.constant 0 : index
      %c0_49 = arith.constant 0 : index
      %c0_50 = arith.constant 0 : index
      %78 = vector.load %arg11[%c0_48, %c0_49, %c0_50] : memref<2x8x32xf32, #tpu.memory_space<vmem>>, vector<2x8x32xf32>
      tpu.vector_store %arg11[%c0_48, %c0_49, %c0_50], %77 {strides = array<i32>} : memref<2x8x32xf32, #tpu.memory_space<vmem>>, vector<2x8x32xf32>,
      %cst_51 = arith.constant 0.000000e+00 : f32
      %79 = vector.broadcast %cst_51 : f32 to vector<2x8x32xf32>
      %c0_52 = arith.constant 0 : index
      %c0_53 = arith.constant 0 : index
      %c0_54 = arith.constant 0 : index
      %80 = vector.load %arg12[%c0_52, %c0_53, %c0_54] : memref<2x8x32xf32, #tpu.memory_space<vmem>>, vector<2x8x32xf32>
      tpu.vector_store %arg12[%c0_52, %c0_53, %c0_54], %79 {strides = array<i32>} : memref<2x8x32xf32, #tpu.memory_space<vmem>>, vector<2x8x32xf32>,
    } else {
    }
    %c0 = arith.constant 0 : index
    %c0_1 = arith.constant 0 : index
    %c0_2 = arith.constant 0 : index
    %3 = vector.load %arg1[%c0, %c0_1, %c0_2] : memref<1x8x16xf32, #tpu.memory_space<vmem>>, vector<1x8x16xf32>
    %4 = vector.shape_cast %3 : vector<1x8x16xf32> to vector<8x16xf32>
    %c0_3 = arith.constant 0 : index
    %c0_4 = arith.constant 0 : index
    %c0_5 = arith.constant 0 : index
    %5 = vector.load %arg11[%c0_3, %c0_4, %c0_5] : memref<2x8x32xf32, #tpu.memory_space<vmem>>, vector<1x8x32xf32>
    %6 = vector.shape_cast %5 : vector<1x8x32xf32> to vector<8x32xf32>
    %c0_6 = arith.constant 0 : index
    %c0_7 = arith.constant 0 : index
    %c0_8 = arith.constant 0 : index
    %7 = vector.load %arg12[%c0_6, %c0_7, %c0_8] : memref<2x8x32xf32, #tpu.memory_space<vmem>>, vector<1x8x32xf32>
    %8 = vector.shape_cast %7 : vector<1x8x32xf32> to vector<8x32xf32>
    %c0_9 = arith.constant 0 : index
    %c0_10 = arith.constant 0 : index
    %9 = vector.load %arg2[%c0_9, %c0_10] : memref<16x128xf32, #tpu.memory_space<vmem>>, vector<16x128xf32>
    %cst = arith.constant dense<0.000000e+00> : vector<8x128xf32>
    %10 = tpu.matmul %4, %9, %cst {dimension_numbers = #tpu.dot_dimension_numbers<[1], [0], [0], [1], [0, 0, 1, 1], [], []>} : vector<8x16xf32>, vector<16x128xf32>, vector<8x128xf32> -> vector<8x128xf32>
    %c0_11 = arith.constant 0 : index
    %c0_12 = arith.constant 0 : index
    %11 = vector.load %arg3[%c0_11, %c0_12] : memref<32x128xf32, #tpu.memory_space<vmem>>, vector<32x128xf32>
    %cst_13 = arith.constant dense<0.000000e+00> : vector<8x128xf32>
    %12 = tpu.matmul %6, %11, %cst_13 {dimension_numbers = #tpu.dot_dimension_numbers<[1], [0], [0], [1], [0, 0, 1, 1], [], []>} : vector<8x32xf32>, vector<32x128xf32>, vector<8x128xf32> -> vector<8x128xf32>
    %13 = arith.addf %10, %12 : vector<8x128xf32>
    %c0_14 = arith.constant 0 : index
    %c0_15 = arith.constant 0 : index
    %14 = vector.load %arg4[%c0_14, %c0_15] : memref<1x128xf32, #tpu.memory_space<vmem>>, vector<1x128xf32>
    %15 = vector.broadcast %14 : vector<1x128xf32> to vector<8x128xf32>
    %16 = arith.addf %13, %15 : vector<8x128xf32>
    %17 = arith.negf %16 : vector<8x128xf32>
    %18 = math.exp %17 : vector<8x128xf32>
    %cst_16 = arith.constant 1.000000e+00 : f32
    %19 = vector.broadcast %cst_16 : f32 to vector<8x128xf32>
    %20 = arith.addf %19, %18 : vector<8x128xf32>
    %21 = arith.divf %19, %20 : vector<8x128xf32>
    %22 = math.tanh %16 : vector<8x128xf32>
    %23 = vector.extract_strided_slice %21 {offsets = [0, 0], sizes = [8, 32], strides = [1, 1]} : vector<8x128xf32> to vector<8x32xf32>
    %24 = vector.extract_strided_slice %21 {offsets = [0, 32], sizes = [8, 32], strides = [1, 1]} : vector<8x128xf32> to vector<8x32xf32>
    %25 = vector.extract_strided_slice %22 {offsets = [0, 64], sizes = [8, 32], strides = [1, 1]} : vector<8x128xf32> to vector<8x32xf32>
    %26 = vector.extract_strided_slice %21 {offsets = [0, 96], sizes = [8, 32], strides = [1, 1]} : vector<8x128xf32> to vector<8x32xf32>
    %27 = arith.mulf %24, %8 : vector<8x32xf32>
    %28 = arith.mulf %23, %25 : vector<8x32xf32>
    %29 = arith.addf %27, %28 : vector<8x32xf32>
    %30 = math.tanh %29 : vector<8x32xf32>
    %31 = arith.mulf %26, %30 : vector<8x32xf32>
    %c0_17 = arith.constant 0 : index
    %c0_18 = arith.constant 0 : index
    %c0_19 = arith.constant 0 : index
    %32 = vector.load %arg11[%c0_17, %c0_18, %c0_19] : memref<2x8x32xf32, #tpu.memory_space<vmem>>, vector<1x8x32xf32>
    %33 = vector.shape_cast %32 : vector<1x8x32xf32> to vector<8x32xf32>
    %34 = vector.shape_cast %31 : vector<8x32xf32> to vector<1x8x32xf32>
    tpu.vector_store %arg11[%c0_17, %c0_18, %c0_19], %34 {strides = array<i32>} : memref<2x8x32xf32, #tpu.memory_space<vmem>>, vector<1x8x32xf32>,
    %c0_20 = arith.constant 0 : index
    %c0_21 = arith.constant 0 : index
    %c0_22 = arith.constant 0 : index
    %35 = vector.load %arg12[%c0_20, %c0_21, %c0_22] : memref<2x8x32xf32, #tpu.memory_space<vmem>>, vector<1x8x32xf32>
    %36 = vector.shape_cast %35 : vector<1x8x32xf32> to vector<8x32xf32>
    %37 = vector.shape_cast %29 : vector<8x32xf32> to vector<1x8x32xf32>
    tpu.vector_store %arg12[%c0_20, %c0_21, %c0_22], %37 {strides = array<i32>} : memref<2x8x32xf32, #tpu.memory_space<vmem>>, vector<1x8x32xf32>,
    %c1 = arith.constant 1 : index
    %c0_23 = arith.constant 0 : index
    %c0_24 = arith.constant 0 : index
    %38 = vector.load %arg11[%c1, %c0_23, %c0_24] : memref<2x8x32xf32, #tpu.memory_space<vmem>>, vector<1x8x32xf32>
    %39 = vector.shape_cast %38 : vector<1x8x32xf32> to vector<8x32xf32>
    %c1_25 = arith.constant 1 : index
    %c0_26 = arith.constant 0 : index
    %c0_27 = arith.constant 0 : index
    %40 = vector.load %arg12[%c1_25, %c0_26, %c0_27] : memref<2x8x32xf32, #tpu.memory_space<vmem>>, vector<1x8x32xf32>
    %41 = vector.shape_cast %40 : vector<1x8x32xf32> to vector<8x32xf32>
    %c0_28 = arith.constant 0 : index
    %c0_29 = arith.constant 0 : index
    %42 = vector.load %arg5[%c0_28, %c0_29] : memref<32x128xf32, #tpu.memory_space<vmem>>, vector<32x128xf32>
    %cst_30 = arith.constant dense<0.000000e+00> : vector<8x128xf32>
    %43 = tpu.matmul %31, %42, %cst_30 {dimension_numbers = #tpu.dot_dimension_numbers<[1], [0], [0], [1], [0, 0, 1, 1], [], []>} : vector<8x32xf32>, vector<32x128xf32>, vector<8x128xf32> -> vector<8x128xf32>
    %c0_31 = arith.constant 0 : index
    %c0_32 = arith.constant 0 : index
    %44 = vector.load %arg6[%c0_31, %c0_32] : memref<32x128xf32, #tpu.memory_space<vmem>>, vector<32x128xf32>
    %cst_33 = arith.constant dense<0.000000e+00> : vector<8x128xf32>
    %45 = tpu.matmul %39, %44, %cst_33 {dimension_numbers = #tpu.dot_dimension_numbers<[1], [0], [0], [1], [0, 0, 1, 1], [], []>} : vector<8x32xf32>, vector<32x128xf32>, vector<8x128xf32> -> vector<8x128xf32>
    %46 = arith.addf %43, %45 : vector<8x128xf32>
    %c0_34 = arith.constant 0 : index
    %c0_35 = arith.constant 0 : index
    %47 = vector.load %arg7[%c0_34, %c0_35] : memref<1x128xf32, #tpu.memory_space<vmem>>, vector<1x128xf32>
    %48 = vector.broadcast %47 : vector<1x128xf32> to vector<8x128xf32>
    %49 = arith.addf %46, %48 : vector<8x128xf32>
    %50 = arith.negf %49 : vector<8x128xf32>
    %51 = math.exp %50 : vector<8x128xf32>
    %cst_36 = arith.constant 1.000000e+00 : f32
    %52 = vector.broadcast %cst_36 : f32 to vector<8x128xf32>
    %53 = arith.addf %52, %51 : vector<8x128xf32>
    %54 = arith.divf %52, %53 : vector<8x128xf32>
    %55 = math.tanh %49 : vector<8x128xf32>
    %56 = vector.extract_strided_slice %54 {offsets = [0, 0], sizes = [8, 32], strides = [1, 1]} : vector<8x128xf32> to vector<8x32xf32>
    %57 = vector.extract_strided_slice %54 {offsets = [0, 32], sizes = [8, 32], strides = [1, 1]} : vector<8x128xf32> to vector<8x32xf32>
    %58 = vector.extract_strided_slice %55 {offsets = [0, 64], sizes = [8, 32], strides = [1, 1]} : vector<8x128xf32> to vector<8x32xf32>
    %59 = vector.extract_strided_slice %54 {offsets = [0, 96], sizes = [8, 32], strides = [1, 1]} : vector<8x128xf32> to vector<8x32xf32>
    %60 = arith.mulf %57, %41 : vector<8x32xf32>
    %61 = arith.mulf %56, %58 : vector<8x32xf32>
    %62 = arith.addf %60, %61 : vector<8x32xf32>
    %63 = math.tanh %62 : vector<8x32xf32>
    %64 = arith.mulf %59, %63 : vector<8x32xf32>
    %c1_37 = arith.constant 1 : index
    %c0_38 = arith.constant 0 : index
    %c0_39 = arith.constant 0 : index
    %65 = vector.load %arg11[%c1_37, %c0_38, %c0_39] : memref<2x8x32xf32, #tpu.memory_space<vmem>>, vector<1x8x32xf32>
    %66 = vector.shape_cast %65 : vector<1x8x32xf32> to vector<8x32xf32>
    %67 = vector.shape_cast %64 : vector<8x32xf32> to vector<1x8x32xf32>
    tpu.vector_store %arg11[%c1_37, %c0_38, %c0_39], %67 {strides = array<i32>} : memref<2x8x32xf32, #tpu.memory_space<vmem>>, vector<1x8x32xf32>,
    %c1_40 = arith.constant 1 : index
    %c0_41 = arith.constant 0 : index
    %c0_42 = arith.constant 0 : index
    %68 = vector.load %arg12[%c1_40, %c0_41, %c0_42] : memref<2x8x32xf32, #tpu.memory_space<vmem>>, vector<1x8x32xf32>
    %69 = vector.shape_cast %68 : vector<1x8x32xf32> to vector<8x32xf32>
    %70 = vector.shape_cast %62 : vector<8x32xf32> to vector<1x8x32xf32>
    tpu.vector_store %arg12[%c1_40, %c0_41, %c0_42], %70 {strides = array<i32>} : memref<2x8x32xf32, #tpu.memory_space<vmem>>, vector<1x8x32xf32>,
    %c0_43 = arith.constant 0 : index
    %c0_44 = arith.constant 0 : index
    %c0_45 = arith.constant 0 : index
    %71 = vector.load %arg8[%c0_43, %c0_44, %c0_45] : memref<1x8x32xf32, #tpu.memory_space<vmem>>, vector<1x8x32xf32>
    %72 = vector.shape_cast %71 : vector<1x8x32xf32> to vector<8x32xf32>
    %73 = vector.shape_cast %64 : vector<8x32xf32> to vector<1x8x32xf32>
    tpu.vector_store %arg8[%c0_43, %c0_44, %c0_45], %73 {strides = array<i32>} : memref<1x8x32xf32, #tpu.memory_space<vmem>>, vector<1x8x32xf32>,
    %c7_i32 = arith.constant 7 : i32
    %74 = arith.cmpi eq, %arg0, %c7_i32 : i32
    %75 = arith.extui %74 : i1 to i32
    %c0_i32_46 = arith.constant 0 : i32
    %76 = arith.cmpi ne, %75, %c0_i32_46 : i32
    scf.if %76 {
      %c0_47 = arith.constant 0 : index
      %c0_48 = arith.constant 0 : index
      %c0_49 = arith.constant 0 : index
      %77 = vector.load %arg11[%c0_47, %c0_48, %c0_49] : memref<2x8x32xf32, #tpu.memory_space<vmem>>, vector<2x8x32xf32>
      %cst_50 = arith.constant -5.000000e+01 : f32
      %cst_51 = arith.constant 5.000000e+01 : f32
      %78 = vector.broadcast %cst_50 : f32 to vector<2x8x32xf32>
      %79 = arith.maximumf %78, %77 : vector<2x8x32xf32>
      %80 = vector.broadcast %cst_51 : f32 to vector<2x8x32xf32>
      %81 = arith.minimumf %80, %79 : vector<2x8x32xf32>
      %c0_52 = arith.constant 0 : index
      %c0_53 = arith.constant 0 : index
      %c0_54 = arith.constant 0 : index
      %82 = vector.load %arg9[%c0_52, %c0_53, %c0_54] : memref<2x8x32xf32, #tpu.memory_space<vmem>>, vector<2x8x32xf32>
      tpu.vector_store %arg9[%c0_52, %c0_53, %c0_54], %81 {strides = array<i32>} : memref<2x8x32xf32, #tpu.memory_space<vmem>>, vector<2x8x32xf32>,
      %c0_55 = arith.constant 0 : index
      %c0_56 = arith.constant 0 : index
      %c0_57 = arith.constant 0 : index
      %83 = vector.load %arg12[%c0_55, %c0_56, %c0_57] : memref<2x8x32xf32, #tpu.memory_space<vmem>>, vector<2x8x32xf32>
      %cst_58 = arith.constant -5.000000e+01 : f32
      %cst_59 = arith.constant 5.000000e+01 : f32
      %84 = vector.broadcast %cst_58 : f32 to vector<2x8x32xf32>
      %85 = arith.maximumf %84, %83 : vector<2x8x32xf32>
      %86 = vector.broadcast %cst_59 : f32 to vector<2x8x32xf32>
      %87 = arith.minimumf %86, %85 : vector<2x8x32xf32>
      %c0_60 = arith.constant 0 : index
      %c0_61 = arith.constant 0 : index
      %c0_62 = arith.constant 0 : index
      %88 = vector.load %arg10[%c0_60, %c0_61, %c0_62] : memref<2x8x32xf32, #tpu.memory_space<vmem>>, vector<2x8x32xf32>
      tpu.vector_store %arg10[%c0_60, %c0_61, %c0_62], %87 {strides = array<i32>} : memref<2x8x32xf32, #tpu.memory_space<vmem>>, vector<2x8x32xf32>,
    } else {
    }
    return
  }
  func.func @transform_0(%arg0: i32) -> (i32, i32, i32) {
    %c0_i32 = arith.constant 0 : i32
    %c0_i32_0 = arith.constant 0 : i32
    %c0_i32_1 = arith.constant 0 : i32
    return %arg0, %c0_i32, %c0_i32_0 : i32, i32, i32
  }
  func.func @transform_1(%arg0: i32) -> (i32, i32) {
    %c0_i32 = arith.constant 0 : i32
    %c0_i32_0 = arith.constant 0 : i32
    %c0_i32_1 = arith.constant 0 : i32
    return %c0_i32, %c0_i32_0 : i32, i32
  }
  func.func @transform_2(%arg0: i32) -> (i32, i32) {
    %c0_i32 = arith.constant 0 : i32
    %c0_i32_0 = arith.constant 0 : i32
    %c0_i32_1 = arith.constant 0 : i32
    return %c0_i32, %c0_i32_0 : i32, i32
  }
  func.func @transform_3(%arg0: i32) -> (i32, i32) {
    %c0_i32 = arith.constant 0 : i32
    %c0_i32_0 = arith.constant 0 : i32
    %c0_i32_1 = arith.constant 0 : i32
    return %c0_i32, %c0_i32_0 : i32, i32
  }
  func.func @transform_4(%arg0: i32) -> (i32, i32) {
    %c0_i32 = arith.constant 0 : i32
    %c0_i32_0 = arith.constant 0 : i32
    %c0_i32_1 = arith.constant 0 : i32
    return %c0_i32, %c0_i32_0 : i32, i32
  }
  func.func @transform_5(%arg0: i32) -> (i32, i32) {
    %c0_i32 = arith.constant 0 : i32
    %c0_i32_0 = arith.constant 0 : i32
    %c0_i32_1 = arith.constant 0 : i32
    return %c0_i32, %c0_i32_0 : i32, i32
  }
  func.func @transform_6(%arg0: i32) -> (i32, i32) {
    %c0_i32 = arith.constant 0 : i32
    %c0_i32_0 = arith.constant 0 : i32
    %c0_i32_1 = arith.constant 0 : i32
    return %c0_i32, %c0_i32_0 : i32, i32
  }
  func.func @transform_7(%arg0: i32) -> (i32, i32, i32) {
    %c0_i32 = arith.constant 0 : i32
    %c0_i32_0 = arith.constant 0 : i32
    %c0_i32_1 = arith.constant 0 : i32
    return %arg0, %c0_i32, %c0_i32_0 : i32, i32, i32
  }
  func.func @transform_8(%arg0: i32) -> (i32, i32, i32) {
    %c0_i32 = arith.constant 0 : i32
    %c0_i32_0 = arith.constant 0 : i32
    %c0_i32_1 = arith.constant 0 : i32
    %c0_i32_2 = arith.constant 0 : i32
    return %c0_i32, %c0_i32_0, %c0_i32_1 : i32, i32, i32
  }
  func.func @transform_9(%arg0: i32) -> (i32, i32, i32) {
    %c0_i32 = arith.constant 0 : i32
    %c0_i32_0 = arith.constant 0 : i32
    %c0_i32_1 = arith.constant 0 : i32
    %c0_i32_2 = arith.constant 0 : i32
    return %c0_i32, %c0_i32_0, %c0_i32_1 : i32, i32, i32
  }
}

module attributes {stable_mosaic.version = 11 : i64} {
  func.func @kernel(%arg0: i32, %arg1: memref<1x8x16xf32, #tpu.memory_space<vmem>>, %arg2: memref<8x8x32xf32, #tpu.memory_space<vmem>>, %arg3: memref<2x8x32xf32, #tpu.memory_space<vmem>>, %arg4: memref<2x8x32xf32, #tpu.memory_space<vmem>>, %arg5: memref<16x128xf32, #tpu.memory_space<vmem>>, %arg6: memref<32x128xf32, #tpu.memory_space<vmem>>, %arg7: memref<1x128xf32, #tpu.memory_space<vmem>>, %arg8: memref<32x128xf32, #tpu.memory_space<vmem>>, %arg9: memref<32x128xf32, #tpu.memory_space<vmem>>, %arg10: memref<1x128xf32, #tpu.memory_space<vmem>>, %arg11: memref<32x8xf32, #tpu.memory_space<vmem>>, %arg12: memref<1x8xf32, #tpu.memory_space<vmem>>, %arg13: memref<32x32xf32, #tpu.memory_space<vmem>>, %arg14: memref<32x32xf32, #tpu.memory_space<vmem>>, %arg15: memref<1x32xf32, #tpu.memory_space<vmem>>, %arg16: memref<32x32xf32, #tpu.memory_space<vmem>>, %arg17: memref<1x32xf32, #tpu.memory_space<vmem>>, %arg18: memref<1x8x32xf32, #tpu.memory_space<vmem>>, %arg19: memref<2x8x32xf32, #tpu.memory_space<vmem>>, %arg20: memref<2x8x32xf32, #tpu.memory_space<vmem>>, %arg21: memref<2x8x32xf32, #tpu.memory_space<vmem>>) attributes {dimension_semantics = [#tpu.dimension_semantics<arbitrary>], iteration_bounds = array<i64: 9>, scalar_prefetch = 0 : i64, scratch_operands = 2 : i64, tpu.core_type = #tpu.core_type<tc>, window_params = [{transform_indices = @transform_0, window_bounds = array<i64: 1, 8, 16>}, {pipeline_mode = #tpu.pipeline_mode<synchronous>, transform_indices = @transform_1, window_bounds = array<i64: 8, 8, 32>}, {pipeline_mode = #tpu.pipeline_mode<synchronous>, transform_indices = @transform_2, window_bounds = array<i64: 2, 8, 32>}, {pipeline_mode = #tpu.pipeline_mode<synchronous>, transform_indices = @transform_3, window_bounds = array<i64: 2, 8, 32>}, {pipeline_mode = #tpu.pipeline_mode<synchronous>, transform_indices = @transform_4, window_bounds = array<i64: 16, 128>}, {pipeline_mode = #tpu.pipeline_mode<synchronous>, transform_indices = @transform_5, window_bounds = array<i64: 32, 128>}, {pipeline_mode = #tpu.pipeline_mode<synchronous>, transform_indices = @transform_6, window_bounds = array<i64: 1, 128>}, {pipeline_mode = #tpu.pipeline_mode<synchronous>, transform_indices = @transform_7, window_bounds = array<i64: 32, 128>}, {pipeline_mode = #tpu.pipeline_mode<synchronous>, transform_indices = @transform_8, window_bounds = array<i64: 32, 128>}, {pipeline_mode = #tpu.pipeline_mode<synchronous>, transform_indices = @transform_9, window_bounds = array<i64: 1, 128>}, {pipeline_mode = #tpu.pipeline_mode<synchronous>, transform_indices = @transform_10, window_bounds = array<i64: 32, 8>}, {pipeline_mode = #tpu.pipeline_mode<synchronous>, transform_indices = @transform_11, window_bounds = array<i64: 1, 8>}, {pipeline_mode = #tpu.pipeline_mode<synchronous>, transform_indices = @transform_12, window_bounds = array<i64: 32, 32>}, {pipeline_mode = #tpu.pipeline_mode<synchronous>, transform_indices = @transform_13, window_bounds = array<i64: 32, 32>}, {pipeline_mode = #tpu.pipeline_mode<synchronous>, transform_indices = @transform_14, window_bounds = array<i64: 1, 32>}, {pipeline_mode = #tpu.pipeline_mode<synchronous>, transform_indices = @transform_15, window_bounds = array<i64: 32, 32>}, {pipeline_mode = #tpu.pipeline_mode<synchronous>, transform_indices = @transform_16, window_bounds = array<i64: 1, 32>}, {transform_indices = @transform_17, window_bounds = array<i64: 1, 8, 32>}, {pipeline_mode = #tpu.pipeline_mode<synchronous>, transform_indices = @transform_18, window_bounds = array<i64: 2, 8, 32>}]} {
    %c0_i32 = arith.constant 0 : i32
    %0 = arith.cmpi eq, %arg0, %c0_i32 : i32
    %1 = arith.extui %0 : i1 to i32
    %c0_i32_0 = arith.constant 0 : i32
    %2 = arith.cmpi ne, %1, %c0_i32_0 : i32
    scf.if %2 {
      %c0_79 = arith.constant 0 : index
      %c0_80 = arith.constant 0 : index
      %c0_81 = arith.constant 0 : index
      %125 = vector.load %arg3[%c0_79, %c0_80, %c0_81] : memref<2x8x32xf32, #tpu.memory_space<vmem>>, vector<2x8x32xf32>
      %c0_82 = arith.constant 0 : index
      %c0_83 = arith.constant 0 : index
      %c0_84 = arith.constant 0 : index
      %126 = vector.load %arg20[%c0_82, %c0_83, %c0_84] : memref<2x8x32xf32, #tpu.memory_space<vmem>>, vector<2x8x32xf32>
      tpu.vector_store %arg20[%c0_82, %c0_83, %c0_84], %125 {strides = array<i32>} : memref<2x8x32xf32, #tpu.memory_space<vmem>>, vector<2x8x32xf32>,
      %c0_85 = arith.constant 0 : index
      %c0_86 = arith.constant 0 : index
      %c0_87 = arith.constant 0 : index
      %127 = vector.load %arg4[%c0_85, %c0_86, %c0_87] : memref<2x8x32xf32, #tpu.memory_space<vmem>>, vector<2x8x32xf32>
      %c0_88 = arith.constant 0 : index
      %c0_89 = arith.constant 0 : index
      %c0_90 = arith.constant 0 : index
      %128 = vector.load %arg21[%c0_88, %c0_89, %c0_90] : memref<2x8x32xf32, #tpu.memory_space<vmem>>, vector<2x8x32xf32>
      tpu.vector_store %arg21[%c0_88, %c0_89, %c0_90], %127 {strides = array<i32>} : memref<2x8x32xf32, #tpu.memory_space<vmem>>, vector<2x8x32xf32>,
    } else {
    }
    %c0 = arith.constant 0 : index
    %c0_1 = arith.constant 0 : index
    %c0_2 = arith.constant 0 : index
    %3 = vector.load %arg1[%c0, %c0_1, %c0_2] : memref<1x8x16xf32, #tpu.memory_space<vmem>>, vector<1x8x16xf32>
    %4 = vector.shape_cast %3 : vector<1x8x16xf32> to vector<8x16xf32>
    %c0_3 = arith.constant 0 : index
    %c0_4 = arith.constant 0 : index
    %c0_5 = arith.constant 0 : index
    %5 = vector.load %arg20[%c0_3, %c0_4, %c0_5] : memref<2x8x32xf32, #tpu.memory_space<vmem>>, vector<1x8x32xf32>
    %6 = vector.shape_cast %5 : vector<1x8x32xf32> to vector<8x32xf32>
    %c0_6 = arith.constant 0 : index
    %c0_7 = arith.constant 0 : index
    %c0_8 = arith.constant 0 : index
    %7 = vector.load %arg21[%c0_6, %c0_7, %c0_8] : memref<2x8x32xf32, #tpu.memory_space<vmem>>, vector<1x8x32xf32>
    %8 = vector.shape_cast %7 : vector<1x8x32xf32> to vector<8x32xf32>
    %c0_9 = arith.constant 0 : index
    %c0_10 = arith.constant 0 : index
    %9 = vector.load %arg5[%c0_9, %c0_10] : memref<16x128xf32, #tpu.memory_space<vmem>>, vector<16x128xf32>
    %cst = arith.constant dense<0.000000e+00> : vector<8x128xf32>
    %10 = tpu.matmul %4, %9, %cst {dimension_numbers = #tpu.dot_dimension_numbers<[1], [0], [0], [1], [0, 0, 1, 1], [], []>} : vector<8x16xf32>, vector<16x128xf32>, vector<8x128xf32> -> vector<8x128xf32>
    %c0_11 = arith.constant 0 : index
    %c0_12 = arith.constant 0 : index
    %11 = vector.load %arg6[%c0_11, %c0_12] : memref<32x128xf32, #tpu.memory_space<vmem>>, vector<32x128xf32>
    %cst_13 = arith.constant dense<0.000000e+00> : vector<8x128xf32>
    %12 = tpu.matmul %6, %11, %cst_13 {dimension_numbers = #tpu.dot_dimension_numbers<[1], [0], [0], [1], [0, 0, 1, 1], [], []>} : vector<8x32xf32>, vector<32x128xf32>, vector<8x128xf32> -> vector<8x128xf32>
    %13 = arith.addf %10, %12 : vector<8x128xf32>
    %c0_14 = arith.constant 0 : index
    %c0_15 = arith.constant 0 : index
    %14 = vector.load %arg7[%c0_14, %c0_15] : memref<1x128xf32, #tpu.memory_space<vmem>>, vector<1x128xf32>
    %15 = vector.broadcast %14 : vector<1x128xf32> to vector<8x128xf32>
    %16 = arith.addf %13, %15 : vector<8x128xf32>
    %17 = arith.negf %16 : vector<8x128xf32>
    %18 = math.exp %17 : vector<8x128xf32>
    %cst_16 = arith.constant 1.000000e+00 : f32
    %19 = vector.broadcast %cst_16 : f32 to vector<8x128xf32>
    %20 = arith.addf %19, %18 : vector<8x128xf32>
    %21 = arith.divf %19, %20 : vector<8x128xf32>
    %22 = math.tanh %16 : vector<8x128xf32>
    %23 = vector.extract_strided_slice %21 {offsets = [0, 0], sizes = [8, 32], strides = [1, 1]} : vector<8x128xf32> to vector<8x32xf32>
    %24 = vector.extract_strided_slice %21 {offsets = [0, 32], sizes = [8, 32], strides = [1, 1]} : vector<8x128xf32> to vector<8x32xf32>
    %25 = vector.extract_strided_slice %22 {offsets = [0, 64], sizes = [8, 32], strides = [1, 1]} : vector<8x128xf32> to vector<8x32xf32>
    %26 = vector.extract_strided_slice %21 {offsets = [0, 96], sizes = [8, 32], strides = [1, 1]} : vector<8x128xf32> to vector<8x32xf32>
    %27 = arith.mulf %24, %8 : vector<8x32xf32>
    %28 = arith.mulf %23, %25 : vector<8x32xf32>
    %29 = arith.addf %27, %28 : vector<8x32xf32>
    %30 = math.tanh %29 : vector<8x32xf32>
    %31 = arith.mulf %26, %30 : vector<8x32xf32>
    %cst_17 = arith.constant -5.000000e+01 : f32
    %cst_18 = arith.constant 5.000000e+01 : f32
    %32 = vector.broadcast %cst_17 : f32 to vector<8x32xf32>
    %33 = arith.maximumf %32, %31 : vector<8x32xf32>
    %34 = vector.broadcast %cst_18 : f32 to vector<8x32xf32>
    %35 = arith.minimumf %34, %33 : vector<8x32xf32>
    %c0_19 = arith.constant 0 : index
    %c0_20 = arith.constant 0 : index
    %c0_21 = arith.constant 0 : index
    %36 = vector.load %arg20[%c0_19, %c0_20, %c0_21] : memref<2x8x32xf32, #tpu.memory_space<vmem>>, vector<1x8x32xf32>
    %37 = vector.shape_cast %36 : vector<1x8x32xf32> to vector<8x32xf32>
    %38 = vector.shape_cast %35 : vector<8x32xf32> to vector<1x8x32xf32>
    tpu.vector_store %arg20[%c0_19, %c0_20, %c0_21], %38 {strides = array<i32>} : memref<2x8x32xf32, #tpu.memory_space<vmem>>, vector<1x8x32xf32>,
    %cst_22 = arith.constant -5.000000e+01 : f32
    %cst_23 = arith.constant 5.000000e+01 : f32
    %39 = vector.broadcast %cst_22 : f32 to vector<8x32xf32>
    %40 = arith.maximumf %39, %29 : vector<8x32xf32>
    %41 = vector.broadcast %cst_23 : f32 to vector<8x32xf32>
    %42 = arith.minimumf %41, %40 : vector<8x32xf32>
    %c0_24 = arith.constant 0 : index
    %c0_25 = arith.constant 0 : index
    %c0_26 = arith.constant 0 : index
    %43 = vector.load %arg21[%c0_24, %c0_25, %c0_26] : memref<2x8x32xf32, #tpu.memory_space<vmem>>, vector<1x8x32xf32>
    %44 = vector.shape_cast %43 : vector<1x8x32xf32> to vector<8x32xf32>
    %45 = vector.shape_cast %42 : vector<8x32xf32> to vector<1x8x32xf32>
    tpu.vector_store %arg21[%c0_24, %c0_25, %c0_26], %45 {strides = array<i32>} : memref<2x8x32xf32, #tpu.memory_space<vmem>>, vector<1x8x32xf32>,
    %c1 = arith.constant 1 : index
    %c0_27 = arith.constant 0 : index
    %c0_28 = arith.constant 0 : index
    %46 = vector.load %arg20[%c1, %c0_27, %c0_28] : memref<2x8x32xf32, #tpu.memory_space<vmem>>, vector<1x8x32xf32>
    %47 = vector.shape_cast %46 : vector<1x8x32xf32> to vector<8x32xf32>
    %c1_29 = arith.constant 1 : index
    %c0_30 = arith.constant 0 : index
    %c0_31 = arith.constant 0 : index
    %48 = vector.load %arg21[%c1_29, %c0_30, %c0_31] : memref<2x8x32xf32, #tpu.memory_space<vmem>>, vector<1x8x32xf32>
    %49 = vector.shape_cast %48 : vector<1x8x32xf32> to vector<8x32xf32>
    %c0_32 = arith.constant 0 : index
    %c0_33 = arith.constant 0 : index
    %50 = vector.load %arg8[%c0_32, %c0_33] : memref<32x128xf32, #tpu.memory_space<vmem>>, vector<32x128xf32>
    %cst_34 = arith.constant dense<0.000000e+00> : vector<8x128xf32>
    %51 = tpu.matmul %31, %50, %cst_34 {dimension_numbers = #tpu.dot_dimension_numbers<[1], [0], [0], [1], [0, 0, 1, 1], [], []>} : vector<8x32xf32>, vector<32x128xf32>, vector<8x128xf32> -> vector<8x128xf32>
    %c0_35 = arith.constant 0 : index
    %c0_36 = arith.constant 0 : index
    %52 = vector.load %arg9[%c0_35, %c0_36] : memref<32x128xf32, #tpu.memory_space<vmem>>, vector<32x128xf32>
    %cst_37 = arith.constant dense<0.000000e+00> : vector<8x128xf32>
    %53 = tpu.matmul %47, %52, %cst_37 {dimension_numbers = #tpu.dot_dimension_numbers<[1], [0], [0], [1], [0, 0, 1, 1], [], []>} : vector<8x32xf32>, vector<32x128xf32>, vector<8x128xf32> -> vector<8x128xf32>
    %54 = arith.addf %51, %53 : vector<8x128xf32>
    %c0_38 = arith.constant 0 : index
    %c0_39 = arith.constant 0 : index
    %55 = vector.load %arg10[%c0_38, %c0_39] : memref<1x128xf32, #tpu.memory_space<vmem>>, vector<1x128xf32>
    %56 = vector.broadcast %55 : vector<1x128xf32> to vector<8x128xf32>
    %57 = arith.addf %54, %56 : vector<8x128xf32>
    %58 = arith.negf %57 : vector<8x128xf32>
    %59 = math.exp %58 : vector<8x128xf32>
    %cst_40 = arith.constant 1.000000e+00 : f32
    %60 = vector.broadcast %cst_40 : f32 to vector<8x128xf32>
    %61 = arith.addf %60, %59 : vector<8x128xf32>
    %62 = arith.divf %60, %61 : vector<8x128xf32>
    %63 = math.tanh %57 : vector<8x128xf32>
    %64 = vector.extract_strided_slice %62 {offsets = [0, 0], sizes = [8, 32], strides = [1, 1]} : vector<8x128xf32> to vector<8x32xf32>
    %65 = vector.extract_strided_slice %62 {offsets = [0, 32], sizes = [8, 32], strides = [1, 1]} : vector<8x128xf32> to vector<8x32xf32>
    %66 = vector.extract_strided_slice %63 {offsets = [0, 64], sizes = [8, 32], strides = [1, 1]} : vector<8x128xf32> to vector<8x32xf32>
    %67 = vector.extract_strided_slice %62 {offsets = [0, 96], sizes = [8, 32], strides = [1, 1]} : vector<8x128xf32> to vector<8x32xf32>
    %68 = arith.mulf %65, %49 : vector<8x32xf32>
    %69 = arith.mulf %64, %66 : vector<8x32xf32>
    %70 = arith.addf %68, %69 : vector<8x32xf32>
    %71 = math.tanh %70 : vector<8x32xf32>
    %72 = arith.mulf %67, %71 : vector<8x32xf32>
    %cst_41 = arith.constant -5.000000e+01 : f32
    %cst_42 = arith.constant 5.000000e+01 : f32
    %73 = vector.broadcast %cst_41 : f32 to vector<8x32xf32>
    %74 = arith.maximumf %73, %72 : vector<8x32xf32>
    %75 = vector.broadcast %cst_42 : f32 to vector<8x32xf32>
    %76 = arith.minimumf %75, %74 : vector<8x32xf32>
    %c1_43 = arith.constant 1 : index
    %c0_44 = arith.constant 0 : index
    %c0_45 = arith.constant 0 : index
    %77 = vector.load %arg20[%c1_43, %c0_44, %c0_45] : memref<2x8x32xf32, #tpu.memory_space<vmem>>, vector<1x8x32xf32>
    %78 = vector.shape_cast %77 : vector<1x8x32xf32> to vector<8x32xf32>
    %79 = vector.shape_cast %76 : vector<8x32xf32> to vector<1x8x32xf32>
    tpu.vector_store %arg20[%c1_43, %c0_44, %c0_45], %79 {strides = array<i32>} : memref<2x8x32xf32, #tpu.memory_space<vmem>>, vector<1x8x32xf32>,
    %cst_46 = arith.constant -5.000000e+01 : f32
    %cst_47 = arith.constant 5.000000e+01 : f32
    %80 = vector.broadcast %cst_46 : f32 to vector<8x32xf32>
    %81 = arith.maximumf %80, %70 : vector<8x32xf32>
    %82 = vector.broadcast %cst_47 : f32 to vector<8x32xf32>
    %83 = arith.minimumf %82, %81 : vector<8x32xf32>
    %c1_48 = arith.constant 1 : index
    %c0_49 = arith.constant 0 : index
    %c0_50 = arith.constant 0 : index
    %84 = vector.load %arg21[%c1_48, %c0_49, %c0_50] : memref<2x8x32xf32, #tpu.memory_space<vmem>>, vector<1x8x32xf32>
    %85 = vector.shape_cast %84 : vector<1x8x32xf32> to vector<8x32xf32>
    %86 = vector.shape_cast %83 : vector<8x32xf32> to vector<1x8x32xf32>
    tpu.vector_store %arg21[%c1_48, %c0_49, %c0_50], %86 {strides = array<i32>} : memref<2x8x32xf32, #tpu.memory_space<vmem>>, vector<1x8x32xf32>,
    %c0_51 = arith.constant 0 : index
    %c0_52 = arith.constant 0 : index
    %87 = vector.load %arg11[%c0_51, %c0_52] : memref<32x8xf32, #tpu.memory_space<vmem>>, vector<32x8xf32>
    %cst_53 = arith.constant dense<0.000000e+00> : vector<8x8xf32>
    %88 = tpu.matmul %72, %87, %cst_53 {dimension_numbers = #tpu.dot_dimension_numbers<[1], [0], [0], [1], [0, 0, 1, 1], [], []>} : vector<8x32xf32>, vector<32x8xf32>, vector<8x8xf32> -> vector<8x8xf32>
    %c0_54 = arith.constant 0 : index
    %c0_55 = arith.constant 0 : index
    %89 = vector.load %arg12[%c0_54, %c0_55] : memref<1x8xf32, #tpu.memory_space<vmem>>, vector<1x8xf32>
    %90 = vector.broadcast %89 : vector<1x8xf32> to vector<8x8xf32>
    %91 = arith.addf %88, %90 : vector<8x8xf32>
    %cst_56 = arith.constant dense<0xFF800000> : vector<8xf32>
    %92 = vector.multi_reduction <maximumf>, %91, %cst_56 [1] : vector<8x8xf32> to vector<8xf32>
    %93 = vector.shape_cast %92 : vector<8xf32> to vector<8x1xf32>
    %94 = vector.broadcast %93 : vector<8x1xf32> to vector<8x8xf32>
    %95 = arith.subf %91, %94 : vector<8x8xf32>
    %96 = math.exp %95 : vector<8x8xf32>
    %cst_57 = arith.constant dense<0.000000e+00> : vector<8xf32>
    %97 = vector.multi_reduction <add>, %96, %cst_57 [1] : vector<8x8xf32> to vector<8xf32>
    %98 = vector.shape_cast %97 : vector<8xf32> to vector<8x1xf32>
    %99 = vector.broadcast %98 : vector<8x1xf32> to vector<8x8xf32>
    %100 = arith.divf %96, %99 : vector<8x8xf32>
    %101 = vector.shape_cast %100 : vector<8x8xf32> to vector<8x1x8xf32>
    %c0_58 = arith.constant 0 : index
    %c0_59 = arith.constant 0 : index
    %c0_60 = arith.constant 0 : index
    %102 = vector.load %arg2[%c0_58, %c0_59, %c0_60] : memref<8x8x32xf32, #tpu.memory_space<vmem>>, vector<8x8x32xf32>
    "tpu.trace_start"() <{level = 10 : i32, message = "bql,blh->bqh"}> : () -> ()
    %cst_61 = arith.constant dense<0.000000e+00> : vector<8x1x32xf32>
    %103 = tpu.matmul %101, %102, %cst_61 {dimension_numbers = #tpu.dot_dimension_numbers<[2], [1], [1], [2], [0, 0, 0, 1, 1, 2], [0], [0]>} : vector<8x1x8xf32>, vector<8x8x32xf32>, vector<8x1x32xf32> -> vector<8x1x32xf32>
    "tpu.trace_stop"() : () -> ()
    %104 = vector.shape_cast %103 : vector<8x1x32xf32> to vector<8x32xf32>
    %c0_62 = arith.constant 0 : index
    %c0_63 = arith.constant 0 : index
    %105 = vector.load %arg13[%c0_62, %c0_63] : memref<32x32xf32, #tpu.memory_space<vmem>>, vector<32x32xf32>
    %cst_64 = arith.constant dense<0.000000e+00> : vector<8x32xf32>
    %106 = tpu.matmul %72, %105, %cst_64 {dimension_numbers = #tpu.dot_dimension_numbers<[1], [0], [0], [1], [0, 0, 1, 1], [], []>} : vector<8x32xf32>, vector<32x32xf32>, vector<8x32xf32> -> vector<8x32xf32>
    %c0_65 = arith.constant 0 : index
    %c0_66 = arith.constant 0 : index
    %107 = vector.load %arg14[%c0_65, %c0_66] : memref<32x32xf32, #tpu.memory_space<vmem>>, vector<32x32xf32>
    %cst_67 = arith.constant dense<0.000000e+00> : vector<8x32xf32>
    %108 = tpu.matmul %104, %107, %cst_67 {dimension_numbers = #tpu.dot_dimension_numbers<[1], [0], [0], [1], [0, 0, 1, 1], [], []>} : vector<8x32xf32>, vector<32x32xf32>, vector<8x32xf32> -> vector<8x32xf32>
    %109 = arith.addf %106, %108 : vector<8x32xf32>
    %c0_68 = arith.constant 0 : index
    %c0_69 = arith.constant 0 : index
    %110 = vector.load %arg15[%c0_68, %c0_69] : memref<1x32xf32, #tpu.memory_space<vmem>>, vector<1x32xf32>
    %111 = vector.broadcast %110 : vector<1x32xf32> to vector<8x32xf32>
    %112 = arith.addf %109, %111 : vector<8x32xf32>
    %113 = math.tanh %112 : vector<8x32xf32>
    %c0_70 = arith.constant 0 : index
    %c0_71 = arith.constant 0 : index
    %114 = vector.load %arg16[%c0_70, %c0_71] : memref<32x32xf32, #tpu.memory_space<vmem>>, vector<32x32xf32>
    %cst_72 = arith.constant dense<0.000000e+00> : vector<8x32xf32>
    %115 = tpu.matmul %113, %114, %cst_72 {dimension_numbers = #tpu.dot_dimension_numbers<[1], [0], [0], [1], [0, 0, 1, 1], [], []>} : vector<8x32xf32>, vector<32x32xf32>, vector<8x32xf32> -> vector<8x32xf32>
    %c0_73 = arith.constant 0 : index
    %c0_74 = arith.constant 0 : index
    %116 = vector.load %arg17[%c0_73, %c0_74] : memref<1x32xf32, #tpu.memory_space<vmem>>, vector<1x32xf32>
    %117 = vector.broadcast %116 : vector<1x32xf32> to vector<8x32xf32>
    %118 = arith.addf %115, %117 : vector<8x32xf32>
    %c0_75 = arith.constant 0 : index
    %c0_76 = arith.constant 0 : index
    %c0_77 = arith.constant 0 : index
    %119 = vector.load %arg18[%c0_75, %c0_76, %c0_77] : memref<1x8x32xf32, #tpu.memory_space<vmem>>, vector<1x8x32xf32>
    %120 = vector.shape_cast %119 : vector<1x8x32xf32> to vector<8x32xf32>
    %121 = vector.shape_cast %118 : vector<8x32xf32> to vector<1x8x32xf32>
    tpu.vector_store %arg18[%c0_75, %c0_76, %c0_77], %121 {strides = array<i32>} : memref<1x8x32xf32, #tpu.memory_space<vmem>>, vector<1x8x32xf32>,
    %c8_i32 = arith.constant 8 : i32
    %122 = arith.cmpi eq, %arg0, %c8_i32 : i32
    %123 = arith.extui %122 : i1 to i32
    %c0_i32_78 = arith.constant 0 : i32
    %124 = arith.cmpi ne, %123, %c0_i32_78 : i32
    scf.if %124 {
      %c0_79 = arith.constant 0 : index
      %c0_80 = arith.constant 0 : index
      %c0_81 = arith.constant 0 : index
      %125 = vector.load %arg20[%c0_79, %c0_80, %c0_81] : memref<2x8x32xf32, #tpu.memory_space<vmem>>, vector<2x8x32xf32>
      %c0_82 = arith.constant 0 : index
      %c0_83 = arith.constant 0 : index
      %c0_84 = arith.constant 0 : index
      %126 = vector.load %arg19[%c0_82, %c0_83, %c0_84] : memref<2x8x32xf32, #tpu.memory_space<vmem>>, vector<2x8x32xf32>
      tpu.vector_store %arg19[%c0_82, %c0_83, %c0_84], %125 {strides = array<i32>} : memref<2x8x32xf32, #tpu.memory_space<vmem>>, vector<2x8x32xf32>,
    } else {
    }
    return
  }
  func.func @transform_0(%arg0: i32) -> (i32, i32, i32) {
    %c0_i32 = arith.constant 0 : i32
    %c0_i32_0 = arith.constant 0 : i32
    %c0_i32_1 = arith.constant 0 : i32
    return %arg0, %c0_i32, %c0_i32_0 : i32, i32, i32
  }
  func.func @transform_1(%arg0: i32) -> (i32, i32, i32) {
    %c0_i32 = arith.constant 0 : i32
    %c0_i32_0 = arith.constant 0 : i32
    %c0_i32_1 = arith.constant 0 : i32
    %c0_i32_2 = arith.constant 0 : i32
    return %c0_i32, %c0_i32_0, %c0_i32_1 : i32, i32, i32
  }
  func.func @transform_2(%arg0: i32) -> (i32, i32, i32) {
    %c0_i32 = arith.constant 0 : i32
    %c0_i32_0 = arith.constant 0 : i32
    %c0_i32_1 = arith.constant 0 : i32
    %c0_i32_2 = arith.constant 0 : i32
    return %c0_i32, %c0_i32_0, %c0_i32_1 : i32, i32, i32
  }
  func.func @transform_3(%arg0: i32) -> (i32, i32, i32) {
    %c0_i32 = arith.constant 0 : i32
    %c0_i32_0 = arith.constant 0 : i32
    %c0_i32_1 = arith.constant 0 : i32
    %c0_i32_2 = arith.constant 0 : i32
    return %c0_i32, %c0_i32_0, %c0_i32_1 : i32, i32, i32
  }
  func.func @transform_4(%arg0: i32) -> (i32, i32) {
    %c0_i32 = arith.constant 0 : i32
    %c0_i32_0 = arith.constant 0 : i32
    %c0_i32_1 = arith.constant 0 : i32
    return %c0_i32, %c0_i32_0 : i32, i32
  }
  func.func @transform_5(%arg0: i32) -> (i32, i32) {
    %c0_i32 = arith.constant 0 : i32
    %c0_i32_0 = arith.constant 0 : i32
    %c0_i32_1 = arith.constant 0 : i32
    return %c0_i32, %c0_i32_0 : i32, i32
  }
  func.func @transform_6(%arg0: i32) -> (i32, i32) {
    %c0_i32 = arith.constant 0 : i32
    %c0_i32_0 = arith.constant 0 : i32
    %c0_i32_1 = arith.constant 0 : i32
    return %c0_i32, %c0_i32_0 : i32, i32
  }
  func.func @transform_7(%arg0: i32) -> (i32, i32) {
    %c0_i32 = arith.constant 0 : i32
    %c0_i32_0 = arith.constant 0 : i32
    %c0_i32_1 = arith.constant 0 : i32
    return %c0_i32, %c0_i32_0 : i32, i32
  }
  func.func @transform_8(%arg0: i32) -> (i32, i32) {
    %c0_i32 = arith.constant 0 : i32
    %c0_i32_0 = arith.constant 0 : i32
    %c0_i32_1 = arith.constant 0 : i32
    return %c0_i32, %c0_i32_0 : i32, i32
  }
  func.func @transform_9(%arg0: i32) -> (i32, i32) {
    %c0_i32 = arith.constant 0 : i32
    %c0_i32_0 = arith.constant 0 : i32
    %c0_i32_1 = arith.constant 0 : i32
    return %c0_i32, %c0_i32_0 : i32, i32
  }
  func.func @transform_10(%arg0: i32) -> (i32, i32) {
    %c0_i32 = arith.constant 0 : i32
    %c0_i32_0 = arith.constant 0 : i32
    %c0_i32_1 = arith.constant 0 : i32
    return %c0_i32, %c0_i32_0 : i32, i32
  }
  func.func @transform_11(%arg0: i32) -> (i32, i32) {
    %c0_i32 = arith.constant 0 : i32
    %c0_i32_0 = arith.constant 0 : i32
    %c0_i32_1 = arith.constant 0 : i32
    return %c0_i32, %c0_i32_0 : i32, i32
  }
  func.func @transform_12(%arg0: i32) -> (i32, i32) {
    %c0_i32 = arith.constant 0 : i32
    %c0_i32_0 = arith.constant 0 : i32
    %c0_i32_1 = arith.constant 0 : i32
    return %c0_i32, %c0_i32_0 : i32, i32
  }
  func.func @transform_13(%arg0: i32) -> (i32, i32) {
    %c0_i32 = arith.constant 0 : i32
    %c0_i32_0 = arith.constant 0 : i32
    %c0_i32_1 = arith.constant 0 : i32
    return %c0_i32, %c0_i32_0 : i32, i32
  }
  func.func @transform_14(%arg0: i32) -> (i32, i32) {
    %c0_i32 = arith.constant 0 : i32
    %c0_i32_0 = arith.constant 0 : i32
    %c0_i32_1 = arith.constant 0 : i32
    return %c0_i32, %c0_i32_0 : i32, i32
  }
  func.func @transform_15(%arg0: i32) -> (i32, i32) {
    %c0_i32 = arith.constant 0 : i32
    %c0_i32_0 = arith.constant 0 : i32
    %c0_i32_1 = arith.constant 0 : i32
    return %c0_i32, %c0_i32_0 : i32, i32
  }
  func.func @transform_16(%arg0: i32) -> (i32, i32) {
    %c0_i32 = arith.constant 0 : i32
    %c0_i32_0 = arith.constant 0 : i32
    %c0_i32_1 = arith.constant 0 : i32
    return %c0_i32, %c0_i32_0 : i32, i32
  }
  func.func @transform_17(%arg0: i32) -> (i32, i32, i32) {
    %c0_i32 = arith.constant 0 : i32
    %c0_i32_0 = arith.constant 0 : i32
    %c0_i32_1 = arith.constant 0 : i32
    return %arg0, %c0_i32, %c0_i32_0 : i32, i32, i32
  }
  func.func @transform_18(%arg0: i32) -> (i32, i32, i32) {
    %c0_i32 = arith.constant 0 : i32
    %c0_i32_0 = arith.constant 0 : i32
    %c0_i32_1 = arith.constant 0 : i32
    %c0_i32_2 = arith.constant 0 : i32
    return %c0_i32, %c0_i32_0, %c0_i32_1 : i32, i32, i32
  }
}

</mosaic_0001>

<llo_original>
// kernel: seq2seq_forward.2
$region0: #{seq2seq_forward.2}
  #allocation0 [shape = 'u32[]', space=smem, size = 0x4, offset = 0x4, fixed_abs, tag = 'smem constant byte address 0x4 - core index']
  #allocation1 [shape = 'u32[72,128]{1,0:T(1,128)}', space=vmem, size = 0x9000, scoped, tag = 'internal scratch']
  #allocation2 [shape = 'f32[2,8,32]{2,1,0:T(8,128)}', space=vmem, size = 0x2000, scoped, tag = 'scratch operand']
  #allocation3 [shape = 'f32[2,8,32]{2,1,0:T(8,128)}', space=vmem, size = 0x2000, scoped, tag = 'scratch operand']
  %s0 = inlined_call_operand.vmem [shape: f32[8,8,16], index: 0, kind: input, shape index: {}]
  %s1 = inlined_call_operand.vmem [shape: f32[16,128], index: 1, kind: input, shape index: {}]
  %s2 = inlined_call_operand.vmem [shape: f32[32,128], index: 2, kind: input, shape index: {}]
  %s3 = inlined_call_operand.vmem [shape: f32[1,128], index: 3, kind: input, shape index: {}]
  %s4 = inlined_call_operand.vmem [shape: f32[32,128], index: 4, kind: input, shape index: {}]
  %s5 = inlined_call_operand.vmem [shape: f32[32,128], index: 5, kind: input, shape index: {}]
  %s6 = inlined_call_operand.vmem [shape: f32[1,128], index: 6, kind: input, shape index: {}]
  %s7 = inlined_call_operand.vmem [shape: f32[8,8,32], index: 7, kind: output, shape index: {0}]
  %s8 = inlined_call_operand.vmem [shape: f32[2,8,32], index: 8, kind: output, shape index: {1}]
  %s9 = inlined_call_operand.vmem [shape: f32[2,8,32], index: 9, kind: output, shape index: {2}]
  %10 = xla_tuple %s7, %s8, %s9
  %s11 = sld [smem:[#allocation0]]
  $region85: #{seq2seq_forward.2} parent=0
    _
  %s13 = ssub.s32 1, %s11
  %s14 = scalar_select 0, %s13, %s11
  loop: start=0, step=1, limit=10
  $region2: #{seq2seq_forward.2} parent=0 // loop_pre_header
    _
  $region3: #{seq2seq_forward.2} parent=0 // loop_header
    %s16 = sphi 0, %s20
    %p17 = scmp.ge.s32.totalorder %s16, 10
    %s26 = sphi 0, %s28
    %s29 = sphi 0, %s26
    %s30 = sphi 0, %s29
    %s46 = sphi 0, %s30
    %s50 = sphi 0, %s50
    %s52 = sphi 0, %s50
    %s53 = sphi 0, %s52
    %s67 = sphi 0, %s53
    %s71 = sphi 0, %s71
    %s73 = sphi 0, %s71
    %s74 = sphi 0, %s73
    %s88 = sphi 0, %s74
    %s92 = sphi 0, %s92
    %s94 = sphi 0, %s92
    %s95 = sphi 0, %s94
    %s109 = sphi 0, %s95
    %s113 = sphi 0, %s113
    %s115 = sphi 0, %s113
    %s116 = sphi 0, %s115
    %s130 = sphi 0, %s116
    %s134 = sphi 0, %s134
    %s136 = sphi 0, %s134
    %s137 = sphi 0, %s136
    %s151 = sphi 0, %s137
    %s155 = sphi 0, %s155
    %s157 = sphi 0, %s155
    %s158 = sphi 0, %s157
    %s172 = sphi 0, %s158
    %s178 = sphi 0, %s180
    %s181 = sphi 0, %s178
    %s182 = sphi 0, %s181
    %s198 = sphi 0, %s182
    %s202 = sphi 0, %s202
    %s204 = sphi 0, %s202
    %s205 = sphi 0, %s204
    %s219 = sphi 0, %s205
    %s223 = sphi 0, %s223
    %s225 = sphi 0, %s223
    %s226 = sphi 0, %s225
    %s240 = sphi 0, %s226
  $region4: #{seq2seq_forward.2} parent=0 // loop_header_branch
    %19 = sbr.rel (%p17) target = $region8
  $region5: #{seq2seq_forward.2} parent=0 // loop_body
    %s21 = ssub.s32 %s16, 1
    %s22 = ssub.s32 %s16, 2
    %s23 = sadd.s32 %s16, 1
    %s24 = ssub.s32 %s16, %s23
    %p25 = scmp.eq.s32.totalorder %s24, 0
    %s27 = sadd.s32 %s26, 1
    %s28 = scalar_select %p25, %s26, %s27
    %p31 = pneg %p25
    %p32 = scmp.eq.s32.totalorder %s16, 7
    %p33 = por %p31, %p32
    %p34 = scmp.ne.s32.totalorder %s26, %s29
    %p35 = scmp.eq.s32.totalorder %s16, 0
    %p36 = por %p34, %p35
    %p37 = scmp.ne.s32.totalorder %s26, %s29
    %p38 = scmp.eq.s32.totalorder %s21, 7
    %p39 = por %p37, %p38
    %p40 = scmp.ne.s32.totalorder %s29, %s30
    %p41 = scmp.eq.s32.totalorder %s21, 0
    %p42 = por %p40, %p41
    %p43 = scmp.ne.s32.totalorder %s29, %s30
    %p44 = scmp.eq.s32.totalorder %s22, 7
    %p45 = por %p43, %p44
    %p47 = scmp.ne.s32.totalorder %s30, %s46
    %p48 = scmp.eq.s32.totalorder %s22, 0
    %p49 = por %p47, %p48
    %s51 = sadd.s32 %s50, 1
    %p54 = scmp.eq.s32.totalorder %s16, 7
    %p55 = scmp.ne.s32.totalorder %s50, %s52
    %p56 = scmp.eq.s32.totalorder %s16, 0
    %p57 = por %p55, %p56
    %p58 = scmp.ne.s32.totalorder %s50, %s52
    %p59 = scmp.eq.s32.totalorder %s21, 7
    %p60 = por %p58, %p59
    %p61 = scmp.ne.s32.totalorder %s52, %s53
    %p62 = scmp.eq.s32.totalorder %s21, 0
    %p63 = por %p61, %p62
    %p64 = scmp.ne.s32.totalorder %s52, %s53
    %p65 = scmp.eq.s32.totalorder %s22, 7
    %p66 = por %p64, %p65
    %p68 = scmp.ne.s32.totalorder %s53, %s67
    %p69 = scmp.eq.s32.totalorder %s22, 0
    %p70 = por %p68, %p69
    %s72 = sadd.s32 %s71, 1
    %p75 = scmp.eq.s32.totalorder %s16, 7
    %p76 = scmp.ne.s32.totalorder %s71, %s73
    %p77 = scmp.eq.s32.totalorder %s16, 0
    %p78 = por %p76, %p77
    %p79 = scmp.ne.s32.totalorder %s71, %s73
    %p80 = scmp.eq.s32.totalorder %s21, 7
    %p81 = por %p79, %p80
    %p82 = scmp.ne.s32.totalorder %s73, %s74
    %p83 = scmp.eq.s32.totalorder %s21, 0
    %p84 = por %p82, %p83
    %p85 = scmp.ne.s32.totalorder %s73, %s74
    %p86 = scmp.eq.s32.totalorder %s22, 7
    %p87 = por %p85, %p86
    %p89 = scmp.ne.s32.totalorder %s74, %s88
    %p90 = scmp.eq.s32.totalorder %s22, 0
    %p91 = por %p89, %p90
    %s93 = sadd.s32 %s92, 1
    %p96 = scmp.eq.s32.totalorder %s16, 7
    %p97 = scmp.ne.s32.totalorder %s92, %s94
    %p98 = scmp.eq.s32.totalorder %s16, 0
    %p99 = por %p97, %p98
    %p100 = scmp.ne.s32.totalorder %s92, %s94
    %p101 = scmp.eq.s32.totalorder %s21, 7
    %p102 = por %p100, %p101
    %p103 = scmp.ne.s32.totalorder %s94, %s95
    %p104 = scmp.eq.s32.totalorder %s21, 0
    %p105 = por %p103, %p104
    %p106 = scmp.ne.s32.totalorder %s94, %s95
    %p107 = scmp.eq.s32.totalorder %s22, 7
    %p108 = por %p106, %p107
    %p110 = scmp.ne.s32.totalorder %s95, %s109
    %p111 = scmp.eq.s32.totalorder %s22, 0
    %p112 = por %p110, %p111
    %s114 = sadd.s32 %s113, 1
    %p117 = scmp.eq.s32.totalorder %s16, 7
    %p118 = scmp.ne.s32.totalorder %s113, %s115
    %p119 = scmp.eq.s32.totalorder %s16, 0
    %p120 = por %p118, %p119
    %p121 = scmp.ne.s32.totalorder %s113, %s115
    %p122 = scmp.eq.s32.totalorder %s21, 7
    %p123 = por %p121, %p122
    %p124 = scmp.ne.s32.totalorder %s115, %s116
    %p125 = scmp.eq.s32.totalorder %s21, 0
    %p126 = por %p124, %p125
    %p127 = scmp.ne.s32.totalorder %s115, %s116
    %p128 = scmp.eq.s32.totalorder %s22, 7
    %p129 = por %p127, %p128
    %p131 = scmp.ne.s32.totalorder %s116, %s130
    %p132 = scmp.eq.s32.totalorder %s22, 0
    %p133 = por %p131, %p132
    %s135 = sadd.s32 %s134, 1
    %p138 = scmp.eq.s32.totalorder %s16, 7
    %p139 = scmp.ne.s32.totalorder %s134, %s136
    %p140 = scmp.eq.s32.totalorder %s16, 0
    %p141 = por %p139, %p140
    %p142 = scmp.ne.s32.totalorder %s134, %s136
    %p143 = scmp.eq.s32.totalorder %s21, 7
    %p144 = por %p142, %p143
    %p145 = scmp.ne.s32.totalorder %s136, %s137
    %p146 = scmp.eq.s32.totalorder %s21, 0
    %p147 = por %p145, %p146
    %p148 = scmp.ne.s32.totalorder %s136, %s137
    %p149 = scmp.eq.s32.totalorder %s22, 7
    %p150 = por %p148, %p149
    %p152 = scmp.ne.s32.totalorder %s137, %s151
    %p153 = scmp.eq.s32.totalorder %s22, 0
    %p154 = por %p152, %p153
    %s156 = sadd.s32 %s155, 1
    %p159 = scmp.eq.s32.totalorder %s16, 7
    %p160 = scmp.ne.s32.totalorder %s155, %s157
    %p161 = scmp.eq.s32.totalorder %s16, 0
    %p162 = por %p160, %p161
    %p163 = scmp.ne.s32.totalorder %s155, %s157
    %p164 = scmp.eq.s32.totalorder %s21, 7
    %p165 = por %p163, %p164
    %p166 = scmp.ne.s32.totalorder %s157, %s158
    %p167 = scmp.eq.s32.totalorder %s21, 0
    %p168 = por %p166, %p167
    %p169 = scmp.ne.s32.totalorder %s157, %s158
    %p170 = scmp.eq.s32.totalorder %s22, 7
    %p171 = por %p169, %p170
    %p173 = scmp.ne.s32.totalorder %s158, %s172
    %p174 = scmp.eq.s32.totalorder %s22, 0
    %p175 = por %p173, %p174
    %s176 = ssub.s32 %s16, %s23
    %p177 = scmp.eq.s32.totalorder %s176, 0
    %s179 = sadd.s32 %s178, 1
    %s180 = scalar_select %p177, %s178, %s179
    %p183 = pneg %p177
    %p184 = scmp.eq.s32.totalorder %s16, 7
    %p185 = por %p183, %p184
    %p186 = scmp.ne.s32.totalorder %s178, %s181
    %p187 = scmp.eq.s32.totalorder %s16, 0
    %p188 = por %p186, %p187
    %p189 = scmp.ne.s32.totalorder %s178, %s181
    %p190 = scmp.eq.s32.totalorder %s21, 7
    %p191 = por %p189, %p190
    %p192 = scmp.ne.s32.totalorder %s181, %s182
    %p193 = scmp.eq.s32.totalorder %s21, 0
    %p194 = por %p192, %p193
    %p195 = scmp.ne.s32.totalorder %s181, %s182
    %p196 = scmp.eq.s32.totalorder %s22, 7
    %p197 = por %p195, %p196
    %p199 = scmp.ne.s32.totalorder %s182, %s198
    %p200 = scmp.eq.s32.totalorder %s22, 0
    %p201 = por %p199, %p200
    %s203 = sadd.s32 %s202, 1
    %p206 = scmp.eq.s32.totalorder %s16, 7
    %p207 = scmp.ne.s32.totalorder %s202, %s204
    %p208 = scmp.eq.s32.totalorder %s16, 0
    %p209 = por %p207, %p208
    %p210 = scmp.ne.s32.totalorder %s202, %s204
    %p211 = scmp.eq.s32.totalorder %s21, 7
    %p212 = por %p210, %p211
    %p213 = scmp.ne.s32.totalorder %s204, %s205
    %p214 = scmp.eq.s32.totalorder %s21, 0
    %p215 = por %p213, %p214
    %p216 = scmp.ne.s32.totalorder %s204, %s205
    %p217 = scmp.eq.s32.totalorder %s22, 7
    %p218 = por %p216, %p217
    %p220 = scmp.ne.s32.totalorder %s205, %s219
    %p221 = scmp.eq.s32.totalorder %s22, 0
    %p222 = por %p220, %p221
    %s224 = sadd.s32 %s223, 1
    %p227 = scmp.eq.s32.totalorder %s16, 7
    %p228 = scmp.ne.s32.totalorder %s223, %s225
    %p229 = scmp.eq.s32.totalorder %s16, 0
    %p230 = por %p228, %p229
    %p231 = scmp.ne.s32.totalorder %s223, %s225
    %p232 = scmp.eq.s32.totalorder %s21, 7
    %p233 = por %p231, %p232
    %p234 = scmp.ne.s32.totalorder %s225, %s226
    %p235 = scmp.eq.s32.totalorder %s21, 0
    %p236 = por %p234, %p235
    %p237 = scmp.ne.s32.totalorder %s225, %s226
    %p238 = scmp.eq.s32.totalorder %s22, 7
    %p239 = por %p237, %p238
    %p241 = scmp.ne.s32.totalorder %s226, %s240
    %p242 = scmp.eq.s32.totalorder %s22, 0
    %p243 = por %p241, %p242
    %p244 = scmp.le.s32.totalorder 1, %s16
    %p245 = scmp.lt.s32.totalorder %s16, 9
    %p246 = pnand %p244, %p245
    %p247 = pneg %p246
    // Predicated region
    $region9: #{seq2seq_forward.2} parent=5 // pred_check
      _
    $region10: #{seq2seq_forward.2} parent=5 // pred_check_branch
      %249 = sbr.rel (%p246) target = $region12
    $region11: #{seq2seq_forward.2} parent=5 // pred_region
      %s250 = ssub.s32 %s16, 1
      // Predicated region
      $region13: #{seq2seq_forward.2} parent=11 // pred_check
        %p251 = pneg %p63
      $region14: #{seq2seq_forward.2} parent=11 // pred_check_branch
        %253 = sbr.rel (%p251) target = $region16
      $region15: #{seq2seq_forward.2} parent=11 // pred_region
        _
      $region16: #{seq2seq_forward.2} parent=11 // pred_fallthru
        _
      // Predicated region
      $region17: #{seq2seq_forward.2} parent=11 // pred_check
        %p254 = pneg %p84
      $region18: #{seq2seq_forward.2} parent=11 // pred_check_branch
        %256 = sbr.rel (%p254) target = $region20
      $region19: #{seq2seq_forward.2} parent=11 // pred_region
        _
      $region20: #{seq2seq_forward.2} parent=11 // pred_fallthru
        _
      // Predicated region
      $region21: #{seq2seq_forward.2} parent=11 // pred_check
        %p257 = pneg %p105
      $region22: #{seq2seq_forward.2} parent=11 // pred_check_branch
        %259 = sbr.rel (%p257) target = $region24
      $region23: #{seq2seq_forward.2} parent=11 // pred_region
        _
      $region24: #{seq2seq_forward.2} parent=11 // pred_fallthru
        _
      // Predicated region
      $region25: #{seq2seq_forward.2} parent=11 // pred_check
        %p260 = pneg %p126
      $region26: #{seq2seq_forward.2} parent=11 // pred_check_branch
        %262 = sbr.rel (%p260) target = $region28
      $region27: #{seq2seq_forward.2} parent=11 // pred_region
        _
      $region28: #{seq2seq_forward.2} parent=11 // pred_fallthru
        _
      // Predicated region
      $region29: #{seq2seq_forward.2} parent=11 // pred_check
        %p263 = pneg %p147
      $region30: #{seq2seq_forward.2} parent=11 // pred_check_branch
        %265 = sbr.rel (%p263) target = $region32
      $region31: #{seq2seq_forward.2} parent=11 // pred_region
        _
      $region32: #{seq2seq_forward.2} parent=11 // pred_fallthru
        _
      // Predicated region
      $region33: #{seq2seq_forward.2} parent=11 // pred_check
        %p266 = pneg %p168
      $region34: #{seq2seq_forward.2} parent=11 // pred_check_branch
        %268 = sbr.rel (%p266) target = $region36
      $region35: #{seq2seq_forward.2} parent=11 // pred_region
        _
      $region36: #{seq2seq_forward.2} parent=11 // pred_fallthru
        _
    $region12: #{seq2seq_forward.2} parent=5 // pred_fallthru
      _
    %p269 = scmp.lt.s32.totalorder %s16, 8
    // Predicated region
    $region37: #{seq2seq_forward.2} parent=5 // pred_check
      %p270 = pneg %p269
    $region38: #{seq2seq_forward.2} parent=5 // pred_check_branch
      %272 = sbr.rel (%p270) target = $region40
    $region39: #{seq2seq_forward.2} parent=5 // pred_region
      // Predicated region
      $region41: #{seq2seq_forward.2} parent=39 // pred_check
        %p273 = pneg %p36
      $region42: #{seq2seq_forward.2} parent=39 // pred_check_branch
        %275 = sbr.rel (%p273) target = $region44
      $region43: #{seq2seq_forward.2} parent=39 // pred_region
        %p276 = scmp.lt.s32.totalorder %s16, 7
        %s277 = scalar_select %p276, %s16, 7
        %s278 = smul.addr %s277, 8
        %s279 = scalar_lea.vmem %s0, %s278
      $region44: #{seq2seq_forward.2} parent=39 // pred_fallthru
        _
    $region40: #{seq2seq_forward.2} parent=5 // pred_fallthru
      _
    %p280 = scmp.le.s32.totalorder 1, %s16
    %p281 = scmp.lt.s32.totalorder %s16, 9
    %p282 = pnand %p280, %p281
    %p283 = pneg %p282
    // Predicated region
    $region45: #{seq2seq_forward.2} parent=5 // pred_check
      _
    $region46: #{seq2seq_forward.2} parent=5 // pred_check_branch
      %285 = sbr.rel (%p282) target = $region48
    $region47: #{seq2seq_forward.2} parent=5 // pred_region
      %s286 = ssub.s32 %s16, 1
      %p287 = scmp.lt.s32.totalorder %s21, 7
      %s288 = scalar_select %p287, %s21, 7
      %s289 = smul.addr %s288, 8
      %s290 = scalar_lea.vmem %s0, %s289
      %p291 = pneg %p42
      %p292 = pneg %p39
      %p293 = pneg %p63
      %p294 = pneg %p60
      %p295 = pneg %p84
      %p296 = pneg %p81
      %p297 = pneg %p105
      %p298 = pneg %p102
      %p299 = pneg %p126
      %p300 = pneg %p123
      %p301 = pneg %p147
      %p302 = pneg %p144
      %p303 = pneg %p168
      %p304 = pneg %p165
      %p305 = pneg %p194
      %p306 = pneg %p191
      %p307 = scmp.lt.s32.totalorder %s21, 7
      %s308 = scalar_select %p307, %s21, 7
      %s309 = smul.addr %s308, 8
      %s310 = scalar_lea.vmem %s7, %s309
      %p311 = pneg %p215
      %p312 = pneg %p212
      %p313 = pneg %p236
      %p314 = pneg %p233
      %p315 = scmp.lt.s32.totalorder %s21, 7
      %s316 = scalar_select %p315, %s21, 7
      %s317 = smul.addr %s316, 8
      %s318 = scalar_lea.vmem %s0, %s317
      %p319 = scmp.lt.s32.totalorder %s21, 7
      %s320 = scalar_select %p319, %s21, 7
      %s321 = smul.addr %s320, 8
      %s322 = scalar_lea.vmem %s7, %s321
      %p323 = scmp.eq.s32.totalorder %s21, 0
      // Predicated region
      $region49: #{seq2seq_forward.2} parent=47 // pred_check
        %p324 = pneg %p323
      $region50: #{seq2seq_forward.2} parent=47 // pred_check_branch
        %326 = sbr.rel (%p324) target = $region52
      $region51: #{seq2seq_forward.2} parent=47 // pred_region
        %vm327 = vcmask 261120
        %328 = vst.msk [vmem:[#allocation2] sm:$0xff] %vm327, 0.0
        %329 = vst.msk [vmem:[#allocation2 + $0x8] sm:$0xff] %vm327, 0.0
        %330 = vst.msk [vmem:[#allocation3] sm:$0xff] %vm327, 0.0
        %331 = vst.msk [vmem:[#allocation3 + $0x8] sm:$0xff] %vm327, 0.0
      $region52: #{seq2seq_forward.2} parent=47 // pred_fallthru
        _
      %v332 = vld [vmem:[%s318] sm:$0xff]
      %v333 = vld [vmem:[#allocation2] sm:$0xff]
      %v334 = vld [vmem:[#allocation3] sm:$0xff]
      %v335 = vld [vmem:[%s1] sm:$0xff]
      %v336 = vld [vmem:[%s1 + $0x8] sm:$0xff]
      %v337 = vld [vmem:[%s2] sm:$0xff]
      %v338 = vld [vmem:[%s2 + $0x8] sm:$0xff]
      %v339 = vld [vmem:[%s2 + $0x10] sm:$0xff]
      %v340 = vld [vmem:[%s2 + $0x18] sm:$0xff]
      %vm341 = vcmask 261120
      %v343 = vsel %vm341, %v333, 0
      %345 = vmatpush.msra.mxu0 0.0
      %346 = vmatpush.msra.mxu0 0.0
      %347 = vmatpush.msra.mxu0 0.0
      %348 = vmatpush.msra.mxu0 0.0
      %349 = vmatpush.msra.mxu0 0.0
      %350 = vmatpush.msra.mxu0 0.0
      %351 = vmatpush.msra.mxu0 0.0
      %352 = vmatpush.msra.mxu0 0.0
      %353 = vmatpush.msra.mxu0 0.0
      %354 = vmatpush.msra.mxu0 0.0
      %355 = vmatpush.msra.mxu0 0.0
      %356 = vmatpush.msra.mxu0 0.0
      %357 = vmatpush.msra.mxu0 %v340
      %358 = vmatpush.msra.mxu0 %v339
      %359 = vmatpush.msra.mxu0 %v338
      %360 = vmatpush.msra.mxu0 %v337
      %361 = vmatmul.f32.gmra.mxu0 %v343
      %v362 = vpop.f32.mrf.mxu0
      %v363 = vadd.f32 0.0, %v362
      %364 = vdwg.mxu0
      %vm365 = vcmask 130048
      %v367 = vsel %vm365, %v332, 0
      %369 = vmatpush.msra.mxu0 0.0
      %370 = vmatpush.msra.mxu0 0.0
      %371 = vmatpush.msra.mxu0 0.0
      %372 = vmatpush.msra.mxu0 0.0
      %373 = vmatpush.msra.mxu0 0.0
      %374 = vmatpush.msra.mxu0 0.0
      %375 = vmatpush.msra.mxu0 0.0
      %376 = vmatpush.msra.mxu0 0.0
      %377 = vmatpush.msra.mxu0 0.0
      %378 = vmatpush.msra.mxu0 0.0
      %379 = vmatpush.msra.mxu0 0.0
      %380 = vmatpush.msra.mxu0 0.0
      %381 = vmatpush.msra.mxu0 0.0
      %382 = vmatpush.msra.mxu0 0.0
      %383 = vmatpush.msra.mxu0 %v336
      %384 = vmatpush.msra.mxu0 %v335
      %385 = vmatmul.f32.gmra.mxu0 %v367
      %v386 = vpop.f32.mrf.mxu0
      %v387 = vadd.f32 %v363, %v386
      %388 = vdwg.mxu0
      %v389 = vld [vmem:[%s3] sm:$0x1]
      %v391 = vperm.slane %v389, 0
      %v393 = vadd.f32 %v387, %v391
      %v394 = vxor.u32 %v393, 2147483648
      %v395 = vmul.f32 %v394, 1.442695
      %v396 = vpow.pop %v395
      %v397 = vadd.f32 %v396, 1.0
      %v398 = vrcp.pop %v397
      %v399 = vmul.f32 %v397, %v398
      %v400 = vsub.f32 1.0, %v399
      %v401 = vmul.f32 %v398, %v400
      %v402 = vadd.f32 %v398, %v401
      %vm403 = vweird.f32 %v397
      %vm404 = vweird.f32 %v398
      %vm405 = vmor %vm403, %vm404
      %v406 = vsel %vm405, %v398, %v402
      %v407 = vand.u32 2147483647, %v397
      %vm408 = vcmp.eq.f32.partialorder %v407, 8.507059e+37
      %v409 = vand.u32 %v397, 2147483648
      %v410 = vor.u32 1.1754944e-38, %v409
      %v411 = vsel %vm408, %v410, %v406
      %v412 = vmul.f32 1.0, %v411
      %v413 = vtanh.pop %v393
      %415 = vrot.lane.b32.xlu0 %v334, 32
      %v416 = vpop.permute.xlu0 %415
      %v418 = vmul.f32 %v412, %v416
      %420 = vrot.lane.b32.xlu0 %v413, 64
      %v421 = vpop.permute.xlu0 %420
      %v423 = vmul.f32 %v412, %v421
      %425 = vrot.lane.b32.xlu0 %v423, 32
      %v426 = vpop.permute.xlu0 %425
      %v428 = vadd.f32 %v418, %v426
      %v429 = vtanh.pop %v428
      %431 = vrot.lane.b32.xlu0 %v429, 64
      %v432 = vpop.permute.xlu0 %431
      %v434 = vmul.f32 %v412, %v432
      %436 = vrot.lane.b32.xlu0 %v434, 32
      %v437 = vpop.permute.xlu0 %436
      %439 = vst.msk [vmem:[#allocation2] sm:$0xff] %vm341, %v437
      %441 = vrot.lane.b32.xlu0 %v428, 96
      %v442 = vpop.permute.xlu0 %441
      %444 = vst.msk [vmem:[#allocation3] sm:$0xff] %vm341, %v442
      %s445 = scalar_lea.vmem [#allocation2], 8
      %v446 = vld [vmem:[%s445] sm:$0xff]
      %s447 = scalar_lea.vmem [#allocation3], 8
      %v448 = vld [vmem:[%s447] sm:$0xff]
      %v449 = vld [vmem:[%s4] sm:$0xff]
      %v450 = vld [vmem:[%s4 + $0x8] sm:$0xff]
      %v451 = vld [vmem:[%s4 + $0x10] sm:$0xff]
      %v452 = vld [vmem:[%s4 + $0x18] sm:$0xff]
      %v453 = vld [vmem:[%s5] sm:$0xff]
      %v454 = vld [vmem:[%s5 + $0x8] sm:$0xff]
      %v455 = vld [vmem:[%s5 + $0x10] sm:$0xff]
      %v456 = vld [vmem:[%s5 + $0x18] sm:$0xff]
      %v458 = vsel %vm341, %v446, 0
      %460 = vmatpush.msra.mxu0 0.0
      %461 = vmatpush.msra.mxu0 0.0
      %462 = vmatpush.msra.mxu0 0.0
      %463 = vmatpush.msra.mxu0 0.0
      %464 = vmatpush.msra.mxu0 0.0
      %465 = vmatpush.msra.mxu0 0.0
      %466 = vmatpush.msra.mxu0 0.0
      %467 = vmatpush.msra.mxu0 0.0
      %468 = vmatpush.msra.mxu0 0.0
      %469 = vmatpush.msra.mxu0 0.0
      %470 = vmatpush.msra.mxu0 0.0
      %471 = vmatpush.msra.mxu0 0.0
      %472 = vmatpush.msra.mxu0 %v456
      %473 = vmatpush.msra.mxu0 %v455
      %474 = vmatpush.msra.mxu0 %v454
      %475 = vmatpush.msra.mxu0 %v453
      %476 = vmatmul.f32.gmra.mxu0 %v458
      %v477 = vpop.f32.mrf.mxu0
      %v478 = vadd.f32 0.0, %v477
      %479 = vdwg.mxu0
      %v480 = vsel %vm341, %v437, 0
      %482 = vmatpush.msra.mxu0 0.0
      %483 = vmatpush.msra.mxu0 0.0
      %484 = vmatpush.msra.mxu0 0.0
      %485 = vmatpush.msra.mxu0 0.0
      %486 = vmatpush.msra.mxu0 0.0
      %487 = vmatpush.msra.mxu0 0.0
      %488 = vmatpush.msra.mxu0 0.0
      %489 = vmatpush.msra.mxu0 0.0
      %490 = vmatpush.msra.mxu0 0.0
      %491 = vmatpush.msra.mxu0 0.0
      %492 = vmatpush.msra.mxu0 0.0
      %493 = vmatpush.msra.mxu0 0.0
      %494 = vmatpush.msra.mxu0 %v452
      %495 = vmatpush.msra.mxu0 %v451
      %496 = vmatpush.msra.mxu0 %v450
      %497 = vmatpush.msra.mxu0 %v449
      %498 = vmatmul.f32.gmra.mxu0 %v480
      %v499 = vpop.f32.mrf.mxu0
      %v500 = vadd.f32 %v478, %v499
      %501 = vdwg.mxu0
      %v502 = vld [vmem:[%s6] sm:$0x1]
      %v504 = vperm.slane %v502, 0
      %v506 = vadd.f32 %v500, %v504
      %v507 = vxor.u32 %v506, 2147483648
      %v508 = vmul.f32 %v507, 1.442695
      %v509 = vpow.pop %v508
      %v510 = vadd.f32 %v509, 1.0
      %v511 = vrcp.pop %v510
      %v512 = vmul.f32 %v510, %v511
      %v513 = vsub.f32 1.0, %v512
      %v514 = vmul.f32 %v511, %v513
      %v515 = vadd.f32 %v511, %v514
      %vm516 = vweird.f32 %v510
      %vm517 = vweird.f32 %v511
      %vm518 = vmor %vm516, %vm517
      %v519 = vsel %vm518, %v511, %v515
      %v520 = vand.u32 2147483647, %v510
      %vm521 = vcmp.eq.f32.partialorder %v520, 8.507059e+37
      %v522 = vand.u32 %v510, 2147483648
      %v523 = vor.u32 1.1754944e-38, %v522
      %v524 = vsel %vm521, %v523, %v519
      %v525 = vmul.f32 1.0, %v524
      %v526 = vtanh.pop %v506
      %528 = vrot.lane.b32.xlu0 %v448, 32
      %v529 = vpop.permute.xlu0 %528
      %v531 = vmul.f32 %v525, %v529
      %533 = vrot.lane.b32.xlu0 %v526, 64
      %v534 = vpop.permute.xlu0 %533
      %v536 = vmul.f32 %v525, %v534
      %538 = vrot.lane.b32.xlu0 %v536, 32
      %v539 = vpop.permute.xlu0 %538
      %v541 = vadd.f32 %v531, %v539
      %v542 = vtanh.pop %v541
      %544 = vrot.lane.b32.xlu0 %v542, 64
      %v545 = vpop.permute.xlu0 %544
      %v547 = vmul.f32 %v525, %v545
      %549 = vrot.lane.b32.xlu0 %v547, 32
      %v550 = vpop.permute.xlu0 %549
      %552 = vst.msk [vmem:[%s445] sm:$0xff] %vm341, %v550
      %554 = vrot.lane.b32.xlu0 %v541, 96
      %v555 = vpop.permute.xlu0 %554
      %557 = vst.msk [vmem:[%s447] sm:$0xff] %vm341, %v555
      %558 = vst.msk [vmem:[%s322] sm:$0xff] %vm341, %v550
      %p559 = scmp.eq.s32.totalorder %s21, 7
      // Predicated region
      $region53: #{seq2seq_forward.2} parent=47 // pred_check
        %p560 = pneg %p559
      $region54: #{seq2seq_forward.2} parent=47 // pred_check_branch
        %562 = sbr.rel (%p560) target = $region56
      $region55: #{seq2seq_forward.2} parent=47 // pred_region
        %v563 = vld [vmem:[#allocation2] sm:$0xff]
        %v564 = vld [vmem:[#allocation2 + $0x8] sm:$0xff]
        %v565 = vmax.f32 %v563, -50.0
        %v566 = vmax.f32 %v564, -50.0
        %v567 = vmin.f32 %v565, 50.0
        %v568 = vmin.f32 %v566, 50.0
        %569 = vst.msk [vmem:[%s8] sm:$0xff] %vm341, %v567
        %570 = vst.msk [vmem:[%s8 + $0x8] sm:$0xff] %vm341, %v568
        %v571 = vld [vmem:[#allocation3] sm:$0xff]
        %v572 = vld [vmem:[#allocation3 + $0x8] sm:$0xff]
        %v573 = vmax.f32 %v571, -50.0
        %v574 = vmax.f32 %v572, -50.0
        %v575 = vmin.f32 %v573, 50.0
        %v576 = vmin.f32 %v574, 50.0
        %577 = vst.msk [vmem:[%s9] sm:$0xff] %vm341, %v575
        %578 = vst.msk [vmem:[%s9 + $0x8] sm:$0xff] %vm341, %v576
      $region56: #{seq2seq_forward.2} parent=47 // pred_fallthru
        _
      %p579 = scmp.lt.s32.totalorder %s21, 7
      %s580 = scalar_select %p579, %s21, 7
      %s581 = smul.addr %s580, 8
      %s582 = scalar_lea.vmem %s7, %s581
      // Predicated region
      $region57: #{seq2seq_forward.2} parent=47 // pred_check
        %p583 = pneg %p191
      $region58: #{seq2seq_forward.2} parent=47 // pred_check_branch
        %585 = sbr.rel (%p583) target = $region60
      $region59: #{seq2seq_forward.2} parent=47 // pred_region
        _
      $region60: #{seq2seq_forward.2} parent=47 // pred_fallthru
        _
      // Predicated region
      $region61: #{seq2seq_forward.2} parent=47 // pred_check
        %p586 = pneg %p212
      $region62: #{seq2seq_forward.2} parent=47 // pred_check_branch
        %588 = sbr.rel (%p586) target = $region64
      $region63: #{seq2seq_forward.2} parent=47 // pred_region
        _
      $region64: #{seq2seq_forward.2} parent=47 // pred_fallthru
        _
      // Predicated region
      $region65: #{seq2seq_forward.2} parent=47 // pred_check
        %p589 = pneg %p233
      $region66: #{seq2seq_forward.2} parent=47 // pred_check_branch
        %591 = sbr.rel (%p589) target = $region68
      $region67: #{seq2seq_forward.2} parent=47 // pred_region
        _
      $region68: #{seq2seq_forward.2} parent=47 // pred_fallthru
        _
      // Predicated region
      $region69: #{seq2seq_forward.2} parent=47 // pred_check
        %p592 = pneg %p212
      $region70: #{seq2seq_forward.2} parent=47 // pred_check_branch
        %594 = sbr.rel (%p592) target = $region72
      $region71: #{seq2seq_forward.2} parent=47 // pred_region
        _
      $region72: #{seq2seq_forward.2} parent=47 // pred_fallthru
        _
      // Predicated region
      $region73: #{seq2seq_forward.2} parent=47 // pred_check
        %p595 = pneg %p233
      $region74: #{seq2seq_forward.2} parent=47 // pred_check_branch
        %597 = sbr.rel (%p595) target = $region76
      $region75: #{seq2seq_forward.2} parent=47 // pred_region
        _
      $region76: #{seq2seq_forward.2} parent=47 // pred_fallthru
        _
    $region48: #{seq2seq_forward.2} parent=5 // pred_fallthru
      _
    %p598 = scmp.le.s32.totalorder 2, %s16
    // Predicated region
    $region77: #{seq2seq_forward.2} parent=5 // pred_check
      %p599 = pneg %p598
    $region78: #{seq2seq_forward.2} parent=5 // pred_check_branch
      %601 = sbr.rel (%p599) target = $region80
    $region79: #{seq2seq_forward.2} parent=5 // pred_region
      %s602 = ssub.s32 %s16, 2
      // Predicated region
      $region81: #{seq2seq_forward.2} parent=79 // pred_check
        %p603 = pneg %p197
      $region82: #{seq2seq_forward.2} parent=79 // pred_check_branch
        %605 = sbr.rel (%p603) target = $region84
      $region83: #{seq2seq_forward.2} parent=79 // pred_region
        %p606 = scmp.lt.s32.totalorder %s22, 7
        %s607 = scalar_select %p606, %s22, 7
        %s608 = smul.addr %s607, 8
        %s609 = scalar_lea.vmem %s7, %s608
      $region84: #{seq2seq_forward.2} parent=79 // pred_fallthru
        _
    $region80: #{seq2seq_forward.2} parent=5 // pred_fallthru
      _
  $region6: #{seq2seq_forward.2} parent=0 // loop_footer
    %s20 = sadd.s32 1, %s16
  $region7: #{seq2seq_forward.2} parent=0 // loop_footer_branch
    %15 = sbr.rel target = $region3
  $region8: #{seq2seq_forward.2} parent=0 // loop_exit
    _

// kernel: seq2seq_forward.3
$region0: #{seq2seq_forward.3}
  #allocation0 [shape = 'u32[]', space=smem, size = 0x4, offset = 0x4, fixed_abs, tag = 'smem constant byte address 0x4 - core index']
  #allocation1 [shape = 'u32[72,128]{1,0:T(1,128)}', space=vmem, size = 0x9000, scoped, tag = 'internal scratch']
  #allocation2 [shape = 'f32[2,8,32]{2,1,0:T(8,128)}', space=vmem, size = 0x2000, scoped, tag = 'scratch operand']
  #allocation3 [shape = 'f32[2,8,32]{2,1,0:T(8,128)}', space=vmem, size = 0x2000, scoped, tag = 'scratch operand']
  %s0 = inlined_call_operand.vmem [shape: f32[9,8,16], index: 0, kind: input, shape index: {}]
  %s1 = inlined_call_operand.vmem [shape: f32[8,8,32], index: 1, kind: input, shape index: {}]
  %s2 = inlined_call_operand.vmem [shape: f32[2,8,32], index: 2, kind: input, shape index: {}]
  %s3 = inlined_call_operand.vmem [shape: f32[2,8,32], index: 3, kind: input, shape index: {}]
  %s4 = inlined_call_operand.vmem [shape: f32[16,128], index: 4, kind: input, shape index: {}]
  %s5 = inlined_call_operand.vmem [shape: f32[32,128], index: 5, kind: input, shape index: {}]
  %s6 = inlined_call_operand.vmem [shape: f32[1,128], index: 6, kind: input, shape index: {}]
  %s7 = inlined_call_operand.vmem [shape: f32[32,128], index: 7, kind: input, shape index: {}]
  %s8 = inlined_call_operand.vmem [shape: f32[32,128], index: 8, kind: input, shape index: {}]
  %s9 = inlined_call_operand.vmem [shape: f32[1,128], index: 9, kind: input, shape index: {}]
  %s10 = inlined_call_operand.vmem [shape: f32[32,8], index: 10, kind: input, shape index: {}]
  %s11 = inlined_call_operand.vmem [shape: f32[1,8], index: 11, kind: input, shape index: {}]
  %s12 = inlined_call_operand.vmem [shape: f32[32,32], index: 12, kind: input, shape index: {}]
  %s13 = inlined_call_operand.vmem [shape: f32[32,32], index: 13, kind: input, shape index: {}]
  %s14 = inlined_call_operand.vmem [shape: f32[1,32], index: 14, kind: input, shape index: {}]
  %s15 = inlined_call_operand.vmem [shape: f32[32,32], index: 15, kind: input, shape index: {}]
  %s16 = inlined_call_operand.vmem [shape: f32[1,32], index: 16, kind: input, shape index: {}]
  %s17 = inlined_call_operand.vmem [shape: f32[9,8,32], index: 17, kind: output, shape index: {0}]
  %s18 = inlined_call_operand.vmem [shape: f32[2,8,32], index: 18, kind: output, shape index: {1}]
  %19 = xla_tuple %s17, %s18
  %s20 = sld [smem:[#allocation0]]
  $region117: #{seq2seq_forward.3} parent=0
    _
  %s22 = ssub.s32 1, %s20
  %s23 = scalar_select 0, %s22, %s20
  loop: start=0, step=1, limit=11
  $region2: #{seq2seq_forward.3} parent=0 // loop_pre_header
    _
  $region3: #{seq2seq_forward.3} parent=0 // loop_header
    %s25 = sphi 0, %s29
    %p26 = scmp.ge.s32.totalorder %s25, 11
    %s35 = sphi 0, %s37
    %s38 = sphi 0, %s35
    %s39 = sphi 0, %s38
    %s55 = sphi 0, %s39
    %s59 = sphi 0, %s59
    %s61 = sphi 0, %s59
    %s62 = sphi 0, %s61
    %s76 = sphi 0, %s62
    %s80 = sphi 0, %s80
    %s82 = sphi 0, %s80
    %s83 = sphi 0, %s82
    %s97 = sphi 0, %s83
    %s101 = sphi 0, %s101
    %s103 = sphi 0, %s101
    %s104 = sphi 0, %s103
    %s118 = sphi 0, %s104
    %s122 = sphi 0, %s122
    %s124 = sphi 0, %s122
    %s125 = sphi 0, %s124
    %s139 = sphi 0, %s125
    %s143 = sphi 0, %s143
    %s145 = sphi 0, %s143
    %s146 = sphi 0, %s145
    %s160 = sphi 0, %s146
    %s164 = sphi 0, %s164
    %s166 = sphi 0, %s164
    %s167 = sphi 0, %s166
    %s181 = sphi 0, %s167
    %s185 = sphi 0, %s185
    %s187 = sphi 0, %s185
    %s188 = sphi 0, %s187
    %s202 = sphi 0, %s188
    %s206 = sphi 0, %s206
    %s208 = sphi 0, %s206
    %s209 = sphi 0, %s208
    %s223 = sphi 0, %s209
    %s227 = sphi 0, %s227
    %s229 = sphi 0, %s227
    %s230 = sphi 0, %s229
    %s244 = sphi 0, %s230
    %s248 = sphi 0, %s248
    %s250 = sphi 0, %s248
    %s251 = sphi 0, %s250
    %s265 = sphi 0, %s251
    %s269 = sphi 0, %s269
    %s271 = sphi 0, %s269
    %s272 = sphi 0, %s271
    %s286 = sphi 0, %s272
    %s290 = sphi 0, %s290
    %s292 = sphi 0, %s290
    %s293 = sphi 0, %s292
    %s307 = sphi 0, %s293
    %s311 = sphi 0, %s311
    %s313 = sphi 0, %s311
    %s314 = sphi 0, %s313
    %s328 = sphi 0, %s314
    %s332 = sphi 0, %s332
    %s334 = sphi 0, %s332
    %s335 = sphi 0, %s334
    %s349 = sphi 0, %s335
    %s353 = sphi 0, %s353
    %s355 = sphi 0, %s353
    %s356 = sphi 0, %s355
    %s370 = sphi 0, %s356
    %s374 = sphi 0, %s374
    %s376 = sphi 0, %s374
    %s377 = sphi 0, %s376
    %s391 = sphi 0, %s377
    %s397 = sphi 0, %s399
    %s400 = sphi 0, %s397
    %s401 = sphi 0, %s400
    %s417 = sphi 0, %s401
    %s421 = sphi 0, %s421
    %s423 = sphi 0, %s421
    %s424 = sphi 0, %s423
    %s438 = sphi 0, %s424
  $region4: #{seq2seq_forward.3} parent=0 // loop_header_branch
    %28 = sbr.rel (%p26) target = $region8
  $region5: #{seq2seq_forward.3} parent=0 // loop_body
    %s30 = ssub.s32 %s25, 1
    %s31 = ssub.s32 %s25, 2
    %s32 = sadd.s32 %s25, 1
    %s33 = ssub.s32 %s25, %s32
    %p34 = scmp.eq.s32.totalorder %s33, 0
    %s36 = sadd.s32 %s35, 1
    %s37 = scalar_select %p34, %s35, %s36
    %p40 = pneg %p34
    %p41 = scmp.eq.s32.totalorder %s25, 8
    %p42 = por %p40, %p41
    %p43 = scmp.ne.s32.totalorder %s35, %s38
    %p44 = scmp.eq.s32.totalorder %s25, 0
    %p45 = por %p43, %p44
    %p46 = scmp.ne.s32.totalorder %s35, %s38
    %p47 = scmp.eq.s32.totalorder %s30, 8
    %p48 = por %p46, %p47
    %p49 = scmp.ne.s32.totalorder %s38, %s39
    %p50 = scmp.eq.s32.totalorder %s30, 0
    %p51 = por %p49, %p50
    %p52 = scmp.ne.s32.totalorder %s38, %s39
    %p53 = scmp.eq.s32.totalorder %s31, 8
    %p54 = por %p52, %p53
    %p56 = scmp.ne.s32.totalorder %s39, %s55
    %p57 = scmp.eq.s32.totalorder %s31, 0
    %p58 = por %p56, %p57
    %s60 = sadd.s32 %s59, 1
    %p63 = scmp.eq.s32.totalorder %s25, 8
    %p64 = scmp.ne.s32.totalorder %s59, %s61
    %p65 = scmp.eq.s32.totalorder %s25, 0
    %p66 = por %p64, %p65
    %p67 = scmp.ne.s32.totalorder %s59, %s61
    %p68 = scmp.eq.s32.totalorder %s30, 8
    %p69 = por %p67, %p68
    %p70 = scmp.ne.s32.totalorder %s61, %s62
    %p71 = scmp.eq.s32.totalorder %s30, 0
    %p72 = por %p70, %p71
    %p73 = scmp.ne.s32.totalorder %s61, %s62
    %p74 = scmp.eq.s32.totalorder %s31, 8
    %p75 = por %p73, %p74
    %p77 = scmp.ne.s32.totalorder %s62, %s76
    %p78 = scmp.eq.s32.totalorder %s31, 0
    %p79 = por %p77, %p78
    %s81 = sadd.s32 %s80, 1
    %p84 = scmp.eq.s32.totalorder %s25, 8
    %p85 = scmp.ne.s32.totalorder %s80, %s82
    %p86 = scmp.eq.s32.totalorder %s25, 0
    %p87 = por %p85, %p86
    %p88 = scmp.ne.s32.totalorder %s80, %s82
    %p89 = scmp.eq.s32.totalorder %s30, 8
    %p90 = por %p88, %p89
    %p91 = scmp.ne.s32.totalorder %s82, %s83
    %p92 = scmp.eq.s32.totalorder %s30, 0
    %p93 = por %p91, %p92
    %p94 = scmp.ne.s32.totalorder %s82, %s83
    %p95 = scmp.eq.s32.totalorder %s31, 8
    %p96 = por %p94, %p95
    %p98 = scmp.ne.s32.totalorder %s83, %s97
    %p99 = scmp.eq.s32.totalorder %s31, 0
    %p100 = por %p98, %p99
    %s102 = sadd.s32 %s101, 1
    %p105 = scmp.eq.s32.totalorder %s25, 8
    %p106 = scmp.ne.s32.totalorder %s101, %s103
    %p107 = scmp.eq.s32.totalorder %s25, 0
    %p108 = por %p106, %p107
    %p109 = scmp.ne.s32.totalorder %s101, %s103
    %p110 = scmp.eq.s32.totalorder %s30, 8
    %p111 = por %p109, %p110
    %p112 = scmp.ne.s32.totalorder %s103, %s104
    %p113 = scmp.eq.s32.totalorder %s30, 0
    %p114 = por %p112, %p113
    %p115 = scmp.ne.s32.totalorder %s103, %s104
    %p116 = scmp.eq.s32.totalorder %s31, 8
    %p117 = por %p115, %p116
    %p119 = scmp.ne.s32.totalorder %s104, %s118
    %p120 = scmp.eq.s32.totalorder %s31, 0
    %p121 = por %p119, %p120
    %s123 = sadd.s32 %s122, 1
    %p126 = scmp.eq.s32.totalorder %s25, 8
    %p127 = scmp.ne.s32.totalorder %s122, %s124
    %p128 = scmp.eq.s32.totalorder %s25, 0
    %p129 = por %p127, %p128
    %p130 = scmp.ne.s32.totalorder %s122, %s124
    %p131 = scmp.eq.s32.totalorder %s30, 8
    %p132 = por %p130, %p131
    %p133 = scmp.ne.s32.totalorder %s124, %s125
    %p134 = scmp.eq.s32.totalorder %s30, 0
    %p135 = por %p133, %p134
    %p136 = scmp.ne.s32.totalorder %s124, %s125
    %p137 = scmp.eq.s32.totalorder %s31, 8
    %p138 = por %p136, %p137
    %p140 = scmp.ne.s32.totalorder %s125, %s139
    %p141 = scmp.eq.s32.totalorder %s31, 0
    %p142 = por %p140, %p141
    %s144 = sadd.s32 %s143, 1
    %p147 = scmp.eq.s32.totalorder %s25, 8
    %p148 = scmp.ne.s32.totalorder %s143, %s145
    %p149 = scmp.eq.s32.totalorder %s25, 0
    %p150 = por %p148, %p149
    %p151 = scmp.ne.s32.totalorder %s143, %s145
    %p152 = scmp.eq.s32.totalorder %s30, 8
    %p153 = por %p151, %p152
    %p154 = scmp.ne.s32.totalorder %s145, %s146
    %p155 = scmp.eq.s32.totalorder %s30, 0
    %p156 = por %p154, %p155
    %p157 = scmp.ne.s32.totalorder %s145, %s146
    %p158 = scmp.eq.s32.totalorder %s31, 8
    %p159 = por %p157, %p158
    %p161 = scmp.ne.s32.totalorder %s146, %s160
    %p162 = scmp.eq.s32.totalorder %s31, 0
    %p163 = por %p161, %p162
    %s165 = sadd.s32 %s164, 1
    %p168 = scmp.eq.s32.totalorder %s25, 8
    %p169 = scmp.ne.s32.totalorder %s164, %s166
    %p170 = scmp.eq.s32.totalorder %s25, 0
    %p171 = por %p169, %p170
    %p172 = scmp.ne.s32.totalorder %s164, %s166
    %p173 = scmp.eq.s32.totalorder %s30, 8
    %p174 = por %p172, %p173
    %p175 = scmp.ne.s32.totalorder %s166, %s167
    %p176 = scmp.eq.s32.totalorder %s30, 0
    %p177 = por %p175, %p176
    %p178 = scmp.ne.s32.totalorder %s166, %s167
    %p179 = scmp.eq.s32.totalorder %s31, 8
    %p180 = por %p178, %p179
    %p182 = scmp.ne.s32.totalorder %s167, %s181
    %p183 = scmp.eq.s32.totalorder %s31, 0
    %p184 = por %p182, %p183
    %s186 = sadd.s32 %s185, 1
    %p189 = scmp.eq.s32.totalorder %s25, 8
    %p190 = scmp.ne.s32.totalorder %s185, %s187
    %p191 = scmp.eq.s32.totalorder %s25, 0
    %p192 = por %p190, %p191
    %p193 = scmp.ne.s32.totalorder %s185, %s187
    %p194 = scmp.eq.s32.totalorder %s30, 8
    %p195 = por %p193, %p194
    %p196 = scmp.ne.s32.totalorder %s187, %s188
    %p197 = scmp.eq.s32.totalorder %s30, 0
    %p198 = por %p196, %p197
    %p199 = scmp.ne.s32.totalorder %s187, %s188
    %p200 = scmp.eq.s32.totalorder %s31, 8
    %p201 = por %p199, %p200
    %p203 = scmp.ne.s32.totalorder %s188, %s202
    %p204 = scmp.eq.s32.totalorder %s31, 0
    %p205 = por %p203, %p204
    %s207 = sadd.s32 %s206, 1
    %p210 = scmp.eq.s32.totalorder %s25, 8
    %p211 = scmp.ne.s32.totalorder %s206, %s208
    %p212 = scmp.eq.s32.totalorder %s25, 0
    %p213 = por %p211, %p212
    %p214 = scmp.ne.s32.totalorder %s206, %s208
    %p215 = scmp.eq.s32.totalorder %s30, 8
    %p216 = por %p214, %p215
    %p217 = scmp.ne.s32.totalorder %s208, %s209
    %p218 = scmp.eq.s32.totalorder %s30, 0
    %p219 = por %p217, %p218
    %p220 = scmp.ne.s32.totalorder %s208, %s209
    %p221 = scmp.eq.s32.totalorder %s31, 8
    %p222 = por %p220, %p221
    %p224 = scmp.ne.s32.totalorder %s209, %s223
    %p225 = scmp.eq.s32.totalorder %s31, 0
    %p226 = por %p224, %p225
    %s228 = sadd.s32 %s227, 1
    %p231 = scmp.eq.s32.totalorder %s25, 8
    %p232 = scmp.ne.s32.totalorder %s227, %s229
    %p233 = scmp.eq.s32.totalorder %s25, 0
    %p234 = por %p232, %p233
    %p235 = scmp.ne.s32.totalorder %s227, %s229
    %p236 = scmp.eq.s32.totalorder %s30, 8
    %p237 = por %p235, %p236
    %p238 = scmp.ne.s32.totalorder %s229, %s230
    %p239 = scmp.eq.s32.totalorder %s30, 0
    %p240 = por %p238, %p239
    %p241 = scmp.ne.s32.totalorder %s229, %s230
    %p242 = scmp.eq.s32.totalorder %s31, 8
    %p243 = por %p241, %p242
    %p245 = scmp.ne.s32.totalorder %s230, %s244
    %p246 = scmp.eq.s32.totalorder %s31, 0
    %p247 = por %p245, %p246
    %s249 = sadd.s32 %s248, 1
    %p252 = scmp.eq.s32.totalorder %s25, 8
    %p253 = scmp.ne.s32.totalorder %s248, %s250
    %p254 = scmp.eq.s32.totalorder %s25, 0
    %p255 = por %p253, %p254
    %p256 = scmp.ne.s32.totalorder %s248, %s250
    %p257 = scmp.eq.s32.totalorder %s30, 8
    %p258 = por %p256, %p257
    %p259 = scmp.ne.s32.totalorder %s250, %s251
    %p260 = scmp.eq.s32.totalorder %s30, 0
    %p261 = por %p259, %p260
    %p262 = scmp.ne.s32.totalorder %s250, %s251
    %p263 = scmp.eq.s32.totalorder %s31, 8
    %p264 = por %p262, %p263
    %p266 = scmp.ne.s32.totalorder %s251, %s265
    %p267 = scmp.eq.s32.totalorder %s31, 0
    %p268 = por %p266, %p267
    %s270 = sadd.s32 %s269, 1
    %p273 = scmp.eq.s32.totalorder %s25, 8
    %p274 = scmp.ne.s32.totalorder %s269, %s271
    %p275 = scmp.eq.s32.totalorder %s25, 0
    %p276 = por %p274, %p275
    %p277 = scmp.ne.s32.totalorder %s269, %s271
    %p278 = scmp.eq.s32.totalorder %s30, 8
    %p279 = por %p277, %p278
    %p280 = scmp.ne.s32.totalorder %s271, %s272
    %p281 = scmp.eq.s32.totalorder %s30, 0
    %p282 = por %p280, %p281
    %p283 = scmp.ne.s32.totalorder %s271, %s272
    %p284 = scmp.eq.s32.totalorder %s31, 8
    %p285 = por %p283, %p284
    %p287 = scmp.ne.s32.totalorder %s272, %s286
    %p288 = scmp.eq.s32.totalorder %s31, 0
    %p289 = por %p287, %p288
    %s291 = sadd.s32 %s290, 1
    %p294 = scmp.eq.s32.totalorder %s25, 8
    %p295 = scmp.ne.s32.totalorder %s290, %s292
    %p296 = scmp.eq.s32.totalorder %s25, 0
    %p297 = por %p295, %p296
    %p298 = scmp.ne.s32.totalorder %s290, %s292
    %p299 = scmp.eq.s32.totalorder %s30, 8
    %p300 = por %p298, %p299
    %p301 = scmp.ne.s32.totalorder %s292, %s293
    %p302 = scmp.eq.s32.totalorder %s30, 0
    %p303 = por %p301, %p302
    %p304 = scmp.ne.s32.totalorder %s292, %s293
    %p305 = scmp.eq.s32.totalorder %s31, 8
    %p306 = por %p304, %p305
    %p308 = scmp.ne.s32.totalorder %s293, %s307
    %p309 = scmp.eq.s32.totalorder %s31, 0
    %p310 = por %p308, %p309
    %s312 = sadd.s32 %s311, 1
    %p315 = scmp.eq.s32.totalorder %s25, 8
    %p316 = scmp.ne.s32.totalorder %s311, %s313
    %p317 = scmp.eq.s32.totalorder %s25, 0
    %p318 = por %p316, %p317
    %p319 = scmp.ne.s32.totalorder %s311, %s313
    %p320 = scmp.eq.s32.totalorder %s30, 8
    %p321 = por %p319, %p320
    %p322 = scmp.ne.s32.totalorder %s313, %s314
    %p323 = scmp.eq.s32.totalorder %s30, 0
    %p324 = por %p322, %p323
    %p325 = scmp.ne.s32.totalorder %s313, %s314
    %p326 = scmp.eq.s32.totalorder %s31, 8
    %p327 = por %p325, %p326
    %p329 = scmp.ne.s32.totalorder %s314, %s328
    %p330 = scmp.eq.s32.totalorder %s31, 0
    %p331 = por %p329, %p330
    %s333 = sadd.s32 %s332, 1
    %p336 = scmp.eq.s32.totalorder %s25, 8
    %p337 = scmp.ne.s32.totalorder %s332, %s334
    %p338 = scmp.eq.s32.totalorder %s25, 0
    %p339 = por %p337, %p338
    %p340 = scmp.ne.s32.totalorder %s332, %s334
    %p341 = scmp.eq.s32.totalorder %s30, 8
    %p342 = por %p340, %p341
    %p343 = scmp.ne.s32.totalorder %s334, %s335
    %p344 = scmp.eq.s32.totalorder %s30, 0
    %p345 = por %p343, %p344
    %p346 = scmp.ne.s32.totalorder %s334, %s335
    %p347 = scmp.eq.s32.totalorder %s31, 8
    %p348 = por %p346, %p347
    %p350 = scmp.ne.s32.totalorder %s335, %s349
    %p351 = scmp.eq.s32.totalorder %s31, 0
    %p352 = por %p350, %p351
    %s354 = sadd.s32 %s353, 1
    %p357 = scmp.eq.s32.totalorder %s25, 8
    %p358 = scmp.ne.s32.totalorder %s353, %s355
    %p359 = scmp.eq.s32.totalorder %s25, 0
    %p360 = por %p358, %p359
    %p361 = scmp.ne.s32.totalorder %s353, %s355
    %p362 = scmp.eq.s32.totalorder %s30, 8
    %p363 = por %p361, %p362
    %p364 = scmp.ne.s32.totalorder %s355, %s356
    %p365 = scmp.eq.s32.totalorder %s30, 0
    %p366 = por %p364, %p365
    %p367 = scmp.ne.s32.totalorder %s355, %s356
    %p368 = scmp.eq.s32.totalorder %s31, 8
    %p369 = por %p367, %p368
    %p371 = scmp.ne.s32.totalorder %s356, %s370
    %p372 = scmp.eq.s32.totalorder %s31, 0
    %p373 = por %p371, %p372
    %s375 = sadd.s32 %s374, 1
    %p378 = scmp.eq.s32.totalorder %s25, 8
    %p379 = scmp.ne.s32.totalorder %s374, %s376
    %p380 = scmp.eq.s32.totalorder %s25, 0
    %p381 = por %p379, %p380
    %p382 = scmp.ne.s32.totalorder %s374, %s376
    %p383 = scmp.eq.s32.totalorder %s30, 8
    %p384 = por %p382, %p383
    %p385 = scmp.ne.s32.totalorder %s376, %s377
    %p386 = scmp.eq.s32.totalorder %s30, 0
    %p387 = por %p385, %p386
    %p388 = scmp.ne.s32.totalorder %s376, %s377
    %p389 = scmp.eq.s32.totalorder %s31, 8
    %p390 = por %p388, %p389
    %p392 = scmp.ne.s32.totalorder %s377, %s391
    %p393 = scmp.eq.s32.totalorder %s31, 0
    %p394 = por %p392, %p393
    %s395 = ssub.s32 %s25, %s32
    %p396 = scmp.eq.s32.totalorder %s395, 0
    %s398 = sadd.s32 %s397, 1
    %s399 = scalar_select %p396, %s397, %s398
    %p402 = pneg %p396
    %p403 = scmp.eq.s32.totalorder %s25, 8
    %p404 = por %p402, %p403
    %p405 = scmp.ne.s32.totalorder %s397, %s400
    %p406 = scmp.eq.s32.totalorder %s25, 0
    %p407 = por %p405, %p406
    %p408 = scmp.ne.s32.totalorder %s397, %s400
    %p409 = scmp.eq.s32.totalorder %s30, 8
    %p410 = por %p408, %p409
    %p411 = scmp.ne.s32.totalorder %s400, %s401
    %p412 = scmp.eq.s32.totalorder %s30, 0
    %p413 = por %p411, %p412
    %p414 = scmp.ne.s32.totalorder %s400, %s401
    %p415 = scmp.eq.s32.totalorder %s31, 8
    %p416 = por %p414, %p415
    %p418 = scmp.ne.s32.totalorder %s401, %s417
    %p419 = scmp.eq.s32.totalorder %s31, 0
    %p420 = por %p418, %p419
    %s422 = sadd.s32 %s421, 1
    %p425 = scmp.eq.s32.totalorder %s25, 8
    %p426 = scmp.ne.s32.totalorder %s421, %s423
    %p427 = scmp.eq.s32.totalorder %s25, 0
    %p428 = por %p426, %p427
    %p429 = scmp.ne.s32.totalorder %s421, %s423
    %p430 = scmp.eq.s32.totalorder %s30, 8
    %p431 = por %p429, %p430
    %p432 = scmp.ne.s32.totalorder %s423, %s424
    %p433 = scmp.eq.s32.totalorder %s30, 0
    %p434 = por %p432, %p433
    %p435 = scmp.ne.s32.totalorder %s423, %s424
    %p436 = scmp.eq.s32.totalorder %s31, 8
    %p437 = por %p435, %p436
    %p439 = scmp.ne.s32.totalorder %s424, %s438
    %p440 = scmp.eq.s32.totalorder %s31, 0
    %p441 = por %p439, %p440
    %p442 = scmp.le.s32.totalorder 1, %s25
    %p443 = scmp.lt.s32.totalorder %s25, 10
    %p444 = pnand %p442, %p443
    %p445 = pneg %p444
    // Predicated region
    $region9: #{seq2seq_forward.3} parent=5 // pred_check
      _
    $region10: #{seq2seq_forward.3} parent=5 // pred_check_branch
      %447 = sbr.rel (%p444) target = $region12
    $region11: #{seq2seq_forward.3} parent=5 // pred_region
      %s448 = ssub.s32 %s25, 1
      // Predicated region
      $region13: #{seq2seq_forward.3} parent=11 // pred_check
        %p449 = pneg %p72
      $region14: #{seq2seq_forward.3} parent=11 // pred_check_branch
        %451 = sbr.rel (%p449) target = $region16
      $region15: #{seq2seq_forward.3} parent=11 // pred_region
        _
      $region16: #{seq2seq_forward.3} parent=11 // pred_fallthru
        _
      // Predicated region
      $region17: #{seq2seq_forward.3} parent=11 // pred_check
        %p452 = pneg %p93
      $region18: #{seq2seq_forward.3} parent=11 // pred_check_branch
        %454 = sbr.rel (%p452) target = $region20
      $region19: #{seq2seq_forward.3} parent=11 // pred_region
        _
      $region20: #{seq2seq_forward.3} parent=11 // pred_fallthru
        _
      // Predicated region
      $region21: #{seq2seq_forward.3} parent=11 // pred_check
        %p455 = pneg %p114
      $region22: #{seq2seq_forward.3} parent=11 // pred_check_branch
        %457 = sbr.rel (%p455) target = $region24
      $region23: #{seq2seq_forward.3} parent=11 // pred_region
        _
      $region24: #{seq2seq_forward.3} parent=11 // pred_fallthru
        _
      // Predicated region
      $region25: #{seq2seq_forward.3} parent=11 // pred_check
        %p458 = pneg %p135
      $region26: #{seq2seq_forward.3} parent=11 // pred_check_branch
        %460 = sbr.rel (%p458) target = $region28
      $region27: #{seq2seq_forward.3} parent=11 // pred_region
        _
      $region28: #{seq2seq_forward.3} parent=11 // pred_fallthru
        _
      // Predicated region
      $region29: #{seq2seq_forward.3} parent=11 // pred_check
        %p461 = pneg %p156
      $region30: #{seq2seq_forward.3} parent=11 // pred_check_branch
        %463 = sbr.rel (%p461) target = $region32
      $region31: #{seq2seq_forward.3} parent=11 // pred_region
        _
      $region32: #{seq2seq_forward.3} parent=11 // pred_fallthru
        _
      // Predicated region
      $region33: #{seq2seq_forward.3} parent=11 // pred_check
        %p464 = pneg %p177
      $region34: #{seq2seq_forward.3} parent=11 // pred_check_branch
        %466 = sbr.rel (%p464) target = $region36
      $region35: #{seq2seq_forward.3} parent=11 // pred_region
        _
      $region36: #{seq2seq_forward.3} parent=11 // pred_fallthru
        _
      // Predicated region
      $region37: #{seq2seq_forward.3} parent=11 // pred_check
        %p467 = pneg %p198
      $region38: #{seq2seq_forward.3} parent=11 // pred_check_branch
        %469 = sbr.rel (%p467) target = $region40
      $region39: #{seq2seq_forward.3} parent=11 // pred_region
        _
      $region40: #{seq2seq_forward.3} parent=11 // pred_fallthru
        _
      // Predicated region
      $region41: #{seq2seq_forward.3} parent=11 // pred_check
        %p470 = pneg %p219
      $region42: #{seq2seq_forward.3} parent=11 // pred_check_branch
        %472 = sbr.rel (%p470) target = $region44
      $region43: #{seq2seq_forward.3} parent=11 // pred_region
        _
      $region44: #{seq2seq_forward.3} parent=11 // pred_fallthru
        _
      // Predicated region
      $region45: #{seq2seq_forward.3} parent=11 // pred_check
        %p473 = pneg %p240
      $region46: #{seq2seq_forward.3} parent=11 // pred_check_branch
        %475 = sbr.rel (%p473) target = $region48
      $region47: #{seq2seq_forward.3} parent=11 // pred_region
        _
      $region48: #{seq2seq_forward.3} parent=11 // pred_fallthru
        _
      // Predicated region
      $region49: #{seq2seq_forward.3} parent=11 // pred_check
        %p476 = pneg %p261
      $region50: #{seq2seq_forward.3} parent=11 // pred_check_branch
        %478 = sbr.rel (%p476) target = $region52
      $region51: #{seq2seq_forward.3} parent=11 // pred_region
        _
      $region52: #{seq2seq_forward.3} parent=11 // pred_fallthru
        _
      // Predicated region
      $region53: #{seq2seq_forward.3} parent=11 // pred_check
        %p479 = pneg %p282
      $region54: #{seq2seq_forward.3} parent=11 // pred_check_branch
        %481 = sbr.rel (%p479) target = $region56
      $region55: #{seq2seq_forward.3} parent=11 // pred_region
        _
      $region56: #{seq2seq_forward.3} parent=11 // pred_fallthru
        _
      // Predicated region
      $region57: #{seq2seq_forward.3} parent=11 // pred_check
        %p482 = pneg %p303
      $region58: #{seq2seq_forward.3} parent=11 // pred_check_branch
        %484 = sbr.rel (%p482) target = $region60
      $region59: #{seq2seq_forward.3} parent=11 // pred_region
        _
      $region60: #{seq2seq_forward.3} parent=11 // pred_fallthru
        _
      // Predicated region
      $region61: #{seq2seq_forward.3} parent=11 // pred_check
        %p485 = pneg %p324
      $region62: #{seq2seq_forward.3} parent=11 // pred_check_branch
        %487 = sbr.rel (%p485) target = $region64
      $region63: #{seq2seq_forward.3} parent=11 // pred_region
        _
      $region64: #{seq2seq_forward.3} parent=11 // pred_fallthru
        _
      // Predicated region
      $region65: #{seq2seq_forward.3} parent=11 // pred_check
        %p488 = pneg %p345
      $region66: #{seq2seq_forward.3} parent=11 // pred_check_branch
        %490 = sbr.rel (%p488) target = $region68
      $region67: #{seq2seq_forward.3} parent=11 // pred_region
        _
      $region68: #{seq2seq_forward.3} parent=11 // pred_fallthru
        _
      // Predicated region
      $region69: #{seq2seq_forward.3} parent=11 // pred_check
        %p491 = pneg %p366
      $region70: #{seq2seq_forward.3} parent=11 // pred_check_branch
        %493 = sbr.rel (%p491) target = $region72
      $region71: #{seq2seq_forward.3} parent=11 // pred_region
        _
      $region72: #{seq2seq_forward.3} parent=11 // pred_fallthru
        _
      // Predicated region
      $region73: #{seq2seq_forward.3} parent=11 // pred_check
        %p494 = pneg %p387
      $region74: #{seq2seq_forward.3} parent=11 // pred_check_branch
        %496 = sbr.rel (%p494) target = $region76
      $region75: #{seq2seq_forward.3} parent=11 // pred_region
        _
      $region76: #{seq2seq_forward.3} parent=11 // pred_fallthru
        _
    $region12: #{seq2seq_forward.3} parent=5 // pred_fallthru
      _
    %p497 = scmp.lt.s32.totalorder %s25, 9
    // Predicated region
    $region77: #{seq2seq_forward.3} parent=5 // pred_check
      %p498 = pneg %p497
    $region78: #{seq2seq_forward.3} parent=5 // pred_check_branch
      %500 = sbr.rel (%p498) target = $region80
    $region79: #{seq2seq_forward.3} parent=5 // pred_region
      // Predicated region
      $region81: #{seq2seq_forward.3} parent=79 // pred_check
        %p501 = pneg %p45
      $region82: #{seq2seq_forward.3} parent=79 // pred_check_branch
        %503 = sbr.rel (%p501) target = $region84
      $region83: #{seq2seq_forward.3} parent=79 // pred_region
        %p504 = scmp.lt.s32.totalorder %s25, 8
        %s505 = scalar_select %p504, %s25, 8
        %s506 = smul.addr %s505, 8
        %s507 = scalar_lea.vmem %s0, %s506
      $region84: #{seq2seq_forward.3} parent=79 // pred_fallthru
        _
    $region80: #{seq2seq_forward.3} parent=5 // pred_fallthru
      _
    %p508 = scmp.le.s32.totalorder 1, %s25
    %p509 = scmp.lt.s32.totalorder %s25, 10
    %p510 = pnand %p508, %p509
    %p511 = pneg %p510
    // Predicated region
    $region85: #{seq2seq_forward.3} parent=5 // pred_check
      _
    $region86: #{seq2seq_forward.3} parent=5 // pred_check_branch
      %513 = sbr.rel (%p510) target = $region88
    $region87: #{seq2seq_forward.3} parent=5 // pred_region
      %s514 = ssub.s32 %s25, 1
      %p515 = scmp.lt.s32.totalorder %s30, 8
      %s516 = scalar_select %p515, %s30, 8
      %s517 = smul.addr %s516, 8
      %s518 = scalar_lea.vmem %s0, %s517
      %p519 = pneg %p51
      %p520 = pneg %p48
      %p521 = pneg %p72
      %p522 = pneg %p69
      %p523 = pneg %p93
      %p524 = pneg %p90
      %p525 = pneg %p114
      %p526 = pneg %p111
      %p527 = pneg %p135
      %p528 = pneg %p132
      %p529 = pneg %p156
      %p530 = pneg %p153
      %p531 = pneg %p177
      %p532 = pneg %p174
      %p533 = pneg %p198
      %p534 = pneg %p195
      %p535 = pneg %p219
      %p536 = pneg %p216
      %p537 = pneg %p240
      %p538 = pneg %p237
      %p539 = pneg %p261
      %p540 = pneg %p258
      %p541 = pneg %p282
      %p542 = pneg %p279
      %p543 = pneg %p303
      %p544 = pneg %p300
      %p545 = pneg %p324
      %p546 = pneg %p321
      %p547 = pneg %p345
      %p548 = pneg %p342
      %p549 = pneg %p366
      %p550 = pneg %p363
      %p551 = pneg %p387
      %p552 = pneg %p384
      %p553 = pneg %p413
      %p554 = pneg %p410
      %p555 = scmp.lt.s32.totalorder %s30, 8
      %s556 = scalar_select %p555, %s30, 8
      %s557 = smul.addr %s556, 8
      %s558 = scalar_lea.vmem %s17, %s557
      %p559 = pneg %p434
      %p560 = pneg %p431
      %p561 = scmp.lt.s32.totalorder %s30, 8
      %s562 = scalar_select %p561, %s30, 8
      %s563 = smul.addr %s562, 8
      %s564 = scalar_lea.vmem %s0, %s563
      %p565 = scmp.lt.s32.totalorder %s30, 8
      %s566 = scalar_select %p565, %s30, 8
      %s567 = smul.addr %s566, 8
      %s568 = scalar_lea.vmem %s17, %s567
      %p569 = scmp.eq.s32.totalorder %s30, 0
      // Predicated region
      $region89: #{seq2seq_forward.3} parent=87 // pred_check
        %p570 = pneg %p569
      $region90: #{seq2seq_forward.3} parent=87 // pred_check_branch
        %572 = sbr.rel (%p570) target = $region92
      $region91: #{seq2seq_forward.3} parent=87 // pred_region
        %v573 = vld [vmem:[%s2] sm:$0xff]
        %v574 = vld [vmem:[%s2 + $0x8] sm:$0xff]
        %vm575 = vcmask 261120
        %576 = vst.msk [vmem:[#allocation2] sm:$0xff] %vm575, %v573
        %577 = vst.msk [vmem:[#allocation2 + $0x8] sm:$0xff] %vm575, %v574
        %v578 = vld [vmem:[%s3] sm:$0xff]
        %v579 = vld [vmem:[%s3 + $0x8] sm:$0xff]
        %580 = vst.msk [vmem:[#allocation3] sm:$0xff] %vm575, %v578
        %581 = vst.msk [vmem:[#allocation3 + $0x8] sm:$0xff] %vm575, %v579
      $region92: #{seq2seq_forward.3} parent=87 // pred_fallthru
        _
      %v582 = vld [vmem:[%s564] sm:$0xff]
      %v583 = vld [vmem:[#allocation2] sm:$0xff]
      %v584 = vld [vmem:[#allocation3] sm:$0xff]
      %v585 = vld [vmem:[%s4] sm:$0xff]
      %v586 = vld [vmem:[%s4 + $0x8] sm:$0xff]
      %v587 = vld [vmem:[%s5] sm:$0xff]
      %v588 = vld [vmem:[%s5 + $0x8] sm:$0xff]
      %v589 = vld [vmem:[%s5 + $0x10] sm:$0xff]
      %v590 = vld [vmem:[%s5 + $0x18] sm:$0xff]
      %vm591 = vcmask 261120
      %v593 = vsel %vm591, %v583, 0
      %595 = vmatpush.msra.mxu0 0.0
      %596 = vmatpush.msra.mxu0 0.0
      %597 = vmatpush.msra.mxu0 0.0
      %598 = vmatpush.msra.mxu0 0.0
      %599 = vmatpush.msra.mxu0 0.0
      %600 = vmatpush.msra.mxu0 0.0
      %601 = vmatpush.msra.mxu0 0.0
      %602 = vmatpush.msra.mxu0 0.0
      %603 = vmatpush.msra.mxu0 0.0
      %604 = vmatpush.msra.mxu0 0.0
      %605 = vmatpush.msra.mxu0 0.0
      %606 = vmatpush.msra.mxu0 0.0
      %607 = vmatpush.msra.mxu0 %v590
      %608 = vmatpush.msra.mxu0 %v589
      %609 = vmatpush.msra.mxu0 %v588
      %610 = vmatpush.msra.mxu0 %v587
      %611 = vmatmul.f32.gmra.mxu0 %v593
      %v612 = vpop.f32.mrf.mxu0
      %v613 = vadd.f32 0.0, %v612
      %614 = vdwg.mxu0
      %vm615 = vcmask 130048
      %v617 = vsel %vm615, %v582, 0
      %619 = vmatpush.msra.mxu0 0.0
      %620 = vmatpush.msra.mxu0 0.0
      %621 = vmatpush.msra.mxu0 0.0
      %622 = vmatpush.msra.mxu0 0.0
      %623 = vmatpush.msra.mxu0 0.0
      %624 = vmatpush.msra.mxu0 0.0
      %625 = vmatpush.msra.mxu0 0.0
      %626 = vmatpush.msra.mxu0 0.0
      %627 = vmatpush.msra.mxu0 0.0
      %628 = vmatpush.msra.mxu0 0.0
      %629 = vmatpush.msra.mxu0 0.0
      %630 = vmatpush.msra.mxu0 0.0
      %631 = vmatpush.msra.mxu0 0.0
      %632 = vmatpush.msra.mxu0 0.0
      %633 = vmatpush.msra.mxu0 %v586
      %634 = vmatpush.msra.mxu0 %v585
      %635 = vmatmul.f32.gmra.mxu0 %v617
      %v636 = vpop.f32.mrf.mxu0
      %v637 = vadd.f32 %v613, %v636
      %638 = vdwg.mxu0
      %v639 = vld [vmem:[%s6] sm:$0x1]
      %v641 = vperm.slane %v639, 0
      %v643 = vadd.f32 %v637, %v641
      %v644 = vxor.u32 %v643, 2147483648
      %v645 = vmul.f32 %v644, 1.442695
      %v646 = vpow.pop %v645
      %v647 = vadd.f32 %v646, 1.0
      %v648 = vrcp.pop %v647
      %v649 = vmul.f32 %v647, %v648
      %v650 = vsub.f32 1.0, %v649
      %v651 = vmul.f32 %v648, %v650
      %v652 = vadd.f32 %v648, %v651
      %vm653 = vweird.f32 %v647
      %vm654 = vweird.f32 %v648
      %vm655 = vmor %vm653, %vm654
      %v656 = vsel %vm655, %v648, %v652
      %v657 = vand.u32 2147483647, %v647
      %vm658 = vcmp.eq.f32.partialorder %v657, 8.507059e+37
      %v659 = vand.u32 %v647, 2147483648
      %v660 = vor.u32 1.1754944e-38, %v659
      %v661 = vsel %vm658, %v660, %v656
      %v662 = vmul.f32 1.0, %v661
      %v663 = vtanh.pop %v643
      %665 = vrot.lane.b32.xlu0 %v584, 32
      %v666 = vpop.permute.xlu0 %665
      %v668 = vmul.f32 %v662, %v666
      %670 = vrot.lane.b32.xlu0 %v663, 64
      %v671 = vpop.permute.xlu0 %670
      %v673 = vmul.f32 %v662, %v671
      %675 = vrot.lane.b32.xlu0 %v673, 32
      %v676 = vpop.permute.xlu0 %675
      %v678 = vadd.f32 %v668, %v676
      %v679 = vtanh.pop %v678
      %681 = vrot.lane.b32.xlu0 %v679, 64
      %v682 = vpop.permute.xlu0 %681
      %v684 = vmul.f32 %v662, %v682
      %v685 = vmax.f32 %v684, -50.0
      %v686 = vmin.f32 %v685, 50.0
      %688 = vrot.lane.b32.xlu0 %v686, 32
      %v689 = vpop.permute.xlu0 %688
      %691 = vst.msk [vmem:[#allocation2] sm:$0xff] %vm591, %v689
      %v692 = vmax.f32 %v678, -50.0
      %v693 = vmin.f32 %v692, 50.0
      %695 = vrot.lane.b32.xlu0 %v693, 96
      %v696 = vpop.permute.xlu0 %695
      %698 = vst.msk [vmem:[#allocation3] sm:$0xff] %vm591, %v696
      %s699 = scalar_lea.vmem [#allocation2], 8
      %v700 = vld [vmem:[%s699] sm:$0xff]
      %s701 = scalar_lea.vmem [#allocation3], 8
      %v702 = vld [vmem:[%s701] sm:$0xff]
      %v703 = vld [vmem:[%s7] sm:$0xff]
      %v704 = vld [vmem:[%s7 + $0x8] sm:$0xff]
      %v705 = vld [vmem:[%s7 + $0x10] sm:$0xff]
      %v706 = vld [vmem:[%s7 + $0x18] sm:$0xff]
      %v707 = vld [vmem:[%s8] sm:$0xff]
      %v708 = vld [vmem:[%s8 + $0x8] sm:$0xff]
      %v709 = vld [vmem:[%s8 + $0x10] sm:$0xff]
      %v710 = vld [vmem:[%s8 + $0x18] sm:$0xff]
      %v712 = vsel %vm591, %v700, 0
      %714 = vmatpush.msra.mxu0 0.0
      %715 = vmatpush.msra.mxu0 0.0
      %716 = vmatpush.msra.mxu0 0.0
      %717 = vmatpush.msra.mxu0 0.0
      %718 = vmatpush.msra.mxu0 0.0
      %719 = vmatpush.msra.mxu0 0.0
      %720 = vmatpush.msra.mxu0 0.0
      %721 = vmatpush.msra.mxu0 0.0
      %722 = vmatpush.msra.mxu0 0.0
      %723 = vmatpush.msra.mxu0 0.0
      %724 = vmatpush.msra.mxu0 0.0
      %725 = vmatpush.msra.mxu0 0.0
      %726 = vmatpush.msra.mxu0 %v710
      %727 = vmatpush.msra.mxu0 %v709
      %728 = vmatpush.msra.mxu0 %v708
      %729 = vmatpush.msra.mxu0 %v707
      %730 = vmatmul.f32.gmra.mxu0 %v712
      %v731 = vpop.f32.mrf.mxu0
      %v732 = vadd.f32 0.0, %v731
      %733 = vdwg.mxu0
      %735 = vrot.lane.b32.xlu0 %v684, 32
      %v736 = vpop.permute.xlu0 %735
      %v737 = vsel %vm591, %v736, 0
      %739 = vmatpush.msra.mxu0 0.0
      %740 = vmatpush.msra.mxu0 0.0
      %741 = vmatpush.msra.mxu0 0.0
      %742 = vmatpush.msra.mxu0 0.0
      %743 = vmatpush.msra.mxu0 0.0
      %744 = vmatpush.msra.mxu0 0.0
      %745 = vmatpush.msra.mxu0 0.0
      %746 = vmatpush.msra.mxu0 0.0
      %747 = vmatpush.msra.mxu0 0.0
      %748 = vmatpush.msra.mxu0 0.0
      %749 = vmatpush.msra.mxu0 0.0
      %750 = vmatpush.msra.mxu0 0.0
      %751 = vmatpush.msra.mxu0 %v706
      %752 = vmatpush.msra.mxu0 %v705
      %753 = vmatpush.msra.mxu0 %v704
      %754 = vmatpush.msra.mxu0 %v703
      %755 = vmatmul.f32.gmra.mxu0 %v737
      %v756 = vpop.f32.mrf.mxu0
      %v757 = vadd.f32 %v732, %v756
      %758 = vdwg.mxu0
      %v759 = vld [vmem:[%s9] sm:$0x1]
      %v761 = vperm.slane %v759, 0
      %v763 = vadd.f32 %v757, %v761
      %v764 = vxor.u32 %v763, 2147483648
      %v765 = vmul.f32 %v764, 1.442695
      %v766 = vpow.pop %v765
      %v767 = vadd.f32 %v766, 1.0
      %v768 = vrcp.pop %v767
      %v769 = vmul.f32 %v767, %v768
      %v770 = vsub.f32 1.0, %v769
      %v771 = vmul.f32 %v768, %v770
      %v772 = vadd.f32 %v768, %v771
      %vm773 = vweird.f32 %v767
      %vm774 = vweird.f32 %v768
      %vm775 = vmor %vm773, %vm774
      %v776 = vsel %vm775, %v768, %v772
      %v777 = vand.u32 2147483647, %v767
      %vm778 = vcmp.eq.f32.partialorder %v777, 8.507059e+37
      %v779 = vand.u32 %v767, 2147483648
      %v780 = vor.u32 1.1754944e-38, %v779
      %v781 = vsel %vm778, %v780, %v776
      %v782 = vmul.f32 1.0, %v781
      %v783 = vtanh.pop %v763
      %785 = vrot.lane.b32.xlu0 %v702, 32
      %v786 = vpop.permute.xlu0 %785
      %v788 = vmul.f32 %v782, %v786
      %790 = vrot.lane.b32.xlu0 %v783, 64
      %v791 = vpop.permute.xlu0 %790
      %v793 = vmul.f32 %v782, %v791
      %795 = vrot.lane.b32.xlu0 %v793, 32
      %v796 = vpop.permute.xlu0 %795
      %v798 = vadd.f32 %v788, %v796
      %v799 = vtanh.pop %v798
      %801 = vrot.lane.b32.xlu0 %v799, 64
      %v802 = vpop.permute.xlu0 %801
      %v804 = vmul.f32 %v782, %v802
      %v805 = vmax.f32 %v804, -50.0
      %v806 = vmin.f32 %v805, 50.0
      %808 = vrot.lane.b32.xlu0 %v806, 32
      %v809 = vpop.permute.xlu0 %808
      %811 = vst.msk [vmem:[%s699] sm:$0xff] %vm591, %v809
      %v812 = vmax.f32 %v798, -50.0
      %v813 = vmin.f32 %v812, 50.0
      %815 = vrot.lane.b32.xlu0 %v813, 96
      %v816 = vpop.permute.xlu0 %815
      %818 = vst.msk [vmem:[%s701] sm:$0xff] %vm591, %v816
      %v819 = vld [vmem:[%s10] sm:$0xff]
      %v820 = vld [vmem:[%s10 + $0x8] sm:$0xff]
      %v821 = vld [vmem:[%s10 + $0x10] sm:$0xff]
      %v822 = vld [vmem:[%s10 + $0x18] sm:$0xff]
      %v823 = vld [vmem:[%s11] sm:$0x1]
      %v825 = vperm.slane %v823, 0
      %828 = vrot.lane.b32.xlu0 %v804, 32
      %v829 = vpop.permute.xlu0 %828
      %v830 = vsel %vm591, %v829, 0
      %832 = vmatpush.msra.mxu0 0.0
      %833 = vmatpush.msra.mxu0 0.0
      %834 = vmatpush.msra.mxu0 0.0
      %835 = vmatpush.msra.mxu0 0.0
      %836 = vmatpush.msra.mxu0 0.0
      %837 = vmatpush.msra.mxu0 0.0
      %838 = vmatpush.msra.mxu0 0.0
      %839 = vmatpush.msra.mxu0 0.0
      %840 = vmatpush.msra.mxu0 0.0
      %841 = vmatpush.msra.mxu0 0.0
      %842 = vmatpush.msra.mxu0 0.0
      %843 = vmatpush.msra.mxu0 0.0
      %844 = vmatpush.msra.mxu0 %v822
      %845 = vmatpush.msra.mxu0 %v821
      %846 = vmatpush.msra.mxu0 %v820
      %847 = vmatpush.msra.mxu0 %v819
      %848 = vmatmul.f32.gmra.mxu0 %v830
      %v849 = vpop.f32.mrf.mxu0
      %v850 = vadd.f32 %v825, %v849
      %851 = vdwg.mxu0
      %vm852 = vcmask 64512
      %v853 = vsel %vm852, %v850, -inf
      %854 = vmax.xlane.f32.xlu0 %v853
      %v855 = vpop.xlane.xlu0 %854
      %v856 = vsub.f32 %v850, %v855
      %v857 = vmul.f32 %v856, 1.442695
      %v858 = vpow.pop %v857
      %v859 = vsel %vm852, %v858, 0.0
      %860 = vadd.xlane.f32.xlu0 %v859
      %v861 = vpop.xlane.xlu0 %860
      %v862 = vrcp.pop %v861
      %v863 = vmul.f32 %v861, %v862
      %v864 = vsub.f32 1.0, %v863
      %v865 = vmul.f32 %v862, %v864
      %v866 = vadd.f32 %v862, %v865
      %vm867 = vweird.f32 %v861
      %vm868 = vweird.f32 %v862
      %vm869 = vmor %vm867, %vm868
      %v870 = vsel %vm869, %v862, %v866
      %v871 = vand.u32 2147483647, %v861
      %vm872 = vcmp.eq.f32.partialorder %v871, 8.507059e+37
      %v873 = vand.u32 %v861, 2147483648
      %v874 = vor.u32 1.1754944e-38, %v873
      %v875 = vsel %vm872, %v874, %v870
      %v876 = vmul.f32 %v858, %v875
      %v878 = vrot.slane %v876, 1
      %v879 = vrot.slane %v876, 2
      %v880 = vrot.slane %v876, 3
      %v881 = vrot.slane %v876, 4
      %v882 = vrot.slane %v876, 5
      %v883 = vrot.slane %v876, 6
      %v884 = vrot.slane %v876, 7
      %v885 = vld [vmem:[%s1] sm:$0xff]
      %v886 = vld [vmem:[%s1 + $0x8] sm:$0xff]
      %v887 = vld [vmem:[%s1 + $0x10] sm:$0xff]
      %v888 = vld [vmem:[%s1 + $0x18] sm:$0xff]
      %v889 = vld [vmem:[%s1 + $0x20] sm:$0xff]
      %v890 = vld [vmem:[%s1 + $0x28] sm:$0xff]
      %v891 = vld [vmem:[%s1 + $0x30] sm:$0xff]
      %v892 = vld [vmem:[%s1 + $0x38] sm:$0xff]
      %v893 = vsel %vm852, %v876, 0
      %895 = vmatpush.msra.mxu0 0.0
      %896 = vmatpush.msra.mxu0 0.0
      %897 = vmatpush.msra.mxu0 0.0
      %898 = vmatpush.msra.mxu0 0.0
      %899 = vmatpush.msra.mxu0 0.0
      %900 = vmatpush.msra.mxu0 0.0
      %901 = vmatpush.msra.mxu0 0.0
      %902 = vmatpush.msra.mxu0 0.0
      %903 = vmatpush.msra.mxu0 0.0
      %904 = vmatpush.msra.mxu0 0.0
      %905 = vmatpush.msra.mxu0 0.0
      %906 = vmatpush.msra.mxu0 0.0
      %907 = vmatpush.msra.mxu0 0.0
      %908 = vmatpush.msra.mxu0 0.0
      %909 = vmatpush.msra.mxu0 0.0
      %910 = vmatpush.msra.mxu0 %v885
      %911 = vmatmul.f32.gmra.mxu0 %v893
      %v912 = vpop.f32.mrf.mxu0
      %v913 = vadd.f32 0.0, %v912
      %914 = vdwg.mxu0
      %v915 = vsel %vm852, %v878, 0
      %917 = vmatpush.msra.mxu0 0.0
      %918 = vmatpush.msra.mxu0 0.0
      %919 = vmatpush.msra.mxu0 0.0
      %920 = vmatpush.msra.mxu0 0.0
      %921 = vmatpush.msra.mxu0 0.0
      %922 = vmatpush.msra.mxu0 0.0
      %923 = vmatpush.msra.mxu0 0.0
      %924 = vmatpush.msra.mxu0 0.0
      %925 = vmatpush.msra.mxu0 0.0
      %926 = vmatpush.msra.mxu0 0.0
      %927 = vmatpush.msra.mxu0 0.0
      %928 = vmatpush.msra.mxu0 0.0
      %929 = vmatpush.msra.mxu0 0.0
      %930 = vmatpush.msra.mxu0 0.0
      %931 = vmatpush.msra.mxu0 0.0
      %932 = vmatpush.msra.mxu0 %v886
      %933 = vmatmul.f32.gmra.mxu0 %v915
      %v934 = vpop.f32.mrf.mxu0
      %v935 = vadd.f32 0.0, %v934
      %936 = vdwg.mxu0
      %v937 = vsel %vm852, %v879, 0
      %939 = vmatpush.msra.mxu0 0.0
      %940 = vmatpush.msra.mxu0 0.0
      %941 = vmatpush.msra.mxu0 0.0
      %942 = vmatpush.msra.mxu0 0.0
      %943 = vmatpush.msra.mxu0 0.0
      %944 = vmatpush.msra.mxu0 0.0
      %945 = vmatpush.msra.mxu0 0.0
      %946 = vmatpush.msra.mxu0 0.0
      %947 = vmatpush.msra.mxu0 0.0
      %948 = vmatpush.msra.mxu0 0.0
      %949 = vmatpush.msra.mxu0 0.0
      %950 = vmatpush.msra.mxu0 0.0
      %951 = vmatpush.msra.mxu0 0.0
      %952 = vmatpush.msra.mxu0 0.0
      %953 = vmatpush.msra.mxu0 0.0
      %954 = vmatpush.msra.mxu0 %v887
      %955 = vmatmul.f32.gmra.mxu0 %v937
      %v956 = vpop.f32.mrf.mxu0
      %v957 = vadd.f32 0.0, %v956
      %958 = vdwg.mxu0
      %v959 = vsel %vm852, %v880, 0
      %961 = vmatpush.msra.mxu0 0.0
      %962 = vmatpush.msra.mxu0 0.0
      %963 = vmatpush.msra.mxu0 0.0
      %964 = vmatpush.msra.mxu0 0.0
      %965 = vmatpush.msra.mxu0 0.0
      %966 = vmatpush.msra.mxu0 0.0
      %967 = vmatpush.msra.mxu0 0.0
      %968 = vmatpush.msra.mxu0 0.0
      %969 = vmatpush.msra.mxu0 0.0
      %970 = vmatpush.msra.mxu0 0.0
      %971 = vmatpush.msra.mxu0 0.0
      %972 = vmatpush.msra.mxu0 0.0
      %973 = vmatpush.msra.mxu0 0.0
      %974 = vmatpush.msra.mxu0 0.0
      %975 = vmatpush.msra.mxu0 0.0
      %976 = vmatpush.msra.mxu0 %v888
      %977 = vmatmul.f32.gmra.mxu0 %v959
      %v978 = vpop.f32.mrf.mxu0
      %v979 = vadd.f32 0.0, %v978
      %980 = vdwg.mxu0
      %v981 = vsel %vm852, %v881, 0
      %983 = vmatpush.msra.mxu0 0.0
      %984 = vmatpush.msra.mxu0 0.0
      %985 = vmatpush.msra.mxu0 0.0
      %986 = vmatpush.msra.mxu0 0.0
      %987 = vmatpush.msra.mxu0 0.0
      %988 = vmatpush.msra.mxu0 0.0
      %989 = vmatpush.msra.mxu0 0.0
      %990 = vmatpush.msra.mxu0 0.0
      %991 = vmatpush.msra.mxu0 0.0
      %992 = vmatpush.msra.mxu0 0.0
      %993 = vmatpush.msra.mxu0 0.0
      %994 = vmatpush.msra.mxu0 0.0
      %995 = vmatpush.msra.mxu0 0.0
      %996 = vmatpush.msra.mxu0 0.0
      %997 = vmatpush.msra.mxu0 0.0
      %998 = vmatpush.msra.mxu0 %v889
      %999 = vmatmul.f32.gmra.mxu0 %v981
      %v1000 = vpop.f32.mrf.mxu0
      %v1001 = vadd.f32 0.0, %v1000
      %1002 = vdwg.mxu0
      %v1003 = vsel %vm852, %v882, 0
      %1005 = vmatpush.msra.mxu0 0.0
      %1006 = vmatpush.msra.mxu0 0.0
      %1007 = vmatpush.msra.mxu0 0.0
      %1008 = vmatpush.msra.mxu0 0.0
      %1009 = vmatpush.msra.mxu0 0.0
      %1010 = vmatpush.msra.mxu0 0.0
      %1011 = vmatpush.msra.mxu0 0.0
      %1012 = vmatpush.msra.mxu0 0.0
      %1013 = vmatpush.msra.mxu0 0.0
      %1014 = vmatpush.msra.mxu0 0.0
      %1015 = vmatpush.msra.mxu0 0.0
      %1016 = vmatpush.msra.mxu0 0.0
      %1017 = vmatpush.msra.mxu0 0.0
      %1018 = vmatpush.msra.mxu0 0.0
      %1019 = vmatpush.msra.mxu0 0.0
      %1020 = vmatpush.msra.mxu0 %v890
      %1021 = vmatmul.f32.gmra.mxu0 %v1003
      %v1022 = vpop.f32.mrf.mxu0
      %v1023 = vadd.f32 0.0, %v1022
      %1024 = vdwg.mxu0
      %v1025 = vsel %vm852, %v883, 0
      %1027 = vmatpush.msra.mxu0 0.0
      %1028 = vmatpush.msra.mxu0 0.0
      %1029 = vmatpush.msra.mxu0 0.0
      %1030 = vmatpush.msra.mxu0 0.0
      %1031 = vmatpush.msra.mxu0 0.0
      %1032 = vmatpush.msra.mxu0 0.0
      %1033 = vmatpush.msra.mxu0 0.0
      %1034 = vmatpush.msra.mxu0 0.0
      %1035 = vmatpush.msra.mxu0 0.0
      %1036 = vmatpush.msra.mxu0 0.0
      %1037 = vmatpush.msra.mxu0 0.0
      %1038 = vmatpush.msra.mxu0 0.0
      %1039 = vmatpush.msra.mxu0 0.0
      %1040 = vmatpush.msra.mxu0 0.0
      %1041 = vmatpush.msra.mxu0 0.0
      %1042 = vmatpush.msra.mxu0 %v891
      %1043 = vmatmul.f32.gmra.mxu0 %v1025
      %v1044 = vpop.f32.mrf.mxu0
      %v1045 = vadd.f32 0.0, %v1044
      %1046 = vdwg.mxu0
      %v1047 = vsel %vm852, %v884, 0
      %1049 = vmatpush.msra.mxu0 0.0
      %1050 = vmatpush.msra.mxu0 0.0
      %1051 = vmatpush.msra.mxu0 0.0
      %1052 = vmatpush.msra.mxu0 0.0
      %1053 = vmatpush.msra.mxu0 0.0
      %1054 = vmatpush.msra.mxu0 0.0
      %1055 = vmatpush.msra.mxu0 0.0
      %1056 = vmatpush.msra.mxu0 0.0
      %1057 = vmatpush.msra.mxu0 0.0
      %1058 = vmatpush.msra.mxu0 0.0
      %1059 = vmatpush.msra.mxu0 0.0
      %1060 = vmatpush.msra.mxu0 0.0
      %1061 = vmatpush.msra.mxu0 0.0
      %1062 = vmatpush.msra.mxu0 0.0
      %1063 = vmatpush.msra.mxu0 0.0
      %1064 = vmatpush.msra.mxu0 %v892
      %1065 = vmatmul.f32.gmra.mxu0 %v1047
      %v1066 = vpop.f32.mrf.mxu0
      %v1067 = vadd.f32 0.0, %v1066
      %1068 = vdwg.mxu0
      %v1069 = vld [vmem:[%s12] sm:$0xff]
      %v1070 = vld [vmem:[%s12 + $0x8] sm:$0xff]
      %v1071 = vld [vmem:[%s12 + $0x10] sm:$0xff]
      %v1072 = vld [vmem:[%s12 + $0x18] sm:$0xff]
      %v1073 = vld [vmem:[%s13] sm:$0xff]
      %v1074 = vld [vmem:[%s13 + $0x8] sm:$0xff]
      %v1075 = vld [vmem:[%s13 + $0x10] sm:$0xff]
      %v1076 = vld [vmem:[%s13 + $0x18] sm:$0xff]
      %v1085 = vrot.slane %v935, 7
      %vm1086 = vcmask 1041409
      %v1087 = vsel %vm1086, %v1085, %v913
      %v1088 = vrot.slane %v957, 6
      %vm1089 = vcmask 1042434
      %v1090 = vsel %vm1089, %v1088, %v1087
      %v1091 = vrot.slane %v979, 5
      %vm1092 = vcmask 1043459
      %v1093 = vsel %vm1092, %v1091, %v1090
      %v1094 = vrot.slane %v1001, 4
      %vm1095 = vcmask 1044484
      %v1096 = vsel %vm1095, %v1094, %v1093
      %v1097 = vrot.slane %v1023, 3
      %vm1098 = vcmask 1045509
      %v1099 = vsel %vm1098, %v1097, %v1096
      %v1100 = vrot.slane %v1045, 2
      %vm1101 = vcmask 1046534
      %v1102 = vsel %vm1101, %v1100, %v1099
      %v1103 = vrot.slane %v1067, 1
      %vm1104 = vcmask 1047559
      %v1105 = vsel %vm1104, %v1103, %v1102
      %v1106 = vsel %vm591, %v1105, 0
      %1108 = vmatpush.msra.mxu0 0.0
      %1109 = vmatpush.msra.mxu0 0.0
      %1110 = vmatpush.msra.mxu0 0.0
      %1111 = vmatpush.msra.mxu0 0.0
      %1112 = vmatpush.msra.mxu0 0.0
      %1113 = vmatpush.msra.mxu0 0.0
      %1114 = vmatpush.msra.mxu0 0.0
      %1115 = vmatpush.msra.mxu0 0.0
      %1116 = vmatpush.msra.mxu0 0.0
      %1117 = vmatpush.msra.mxu0 0.0
      %1118 = vmatpush.msra.mxu0 0.0
      %1119 = vmatpush.msra.mxu0 0.0
      %1120 = vmatpush.msra.mxu0 %v1076
      %1121 = vmatpush.msra.mxu0 %v1075
      %1122 = vmatpush.msra.mxu0 %v1074
      %1123 = vmatpush.msra.mxu0 %v1073
      %1124 = vmatmul.f32.gmra.mxu0 %v1106
      %v1125 = vpop.f32.mrf.mxu0
      %v1126 = vadd.f32 0.0, %v1125
      %1127 = vdwg.mxu0
      %1128 = vmatpush.msra.mxu0 0.0
      %1129 = vmatpush.msra.mxu0 0.0
      %1130 = vmatpush.msra.mxu0 0.0
      %1131 = vmatpush.msra.mxu0 0.0
      %1132 = vmatpush.msra.mxu0 0.0
      %1133 = vmatpush.msra.mxu0 0.0
      %1134 = vmatpush.msra.mxu0 0.0
      %1135 = vmatpush.msra.mxu0 0.0
      %1136 = vmatpush.msra.mxu0 0.0
      %1137 = vmatpush.msra.mxu0 0.0
      %1138 = vmatpush.msra.mxu0 0.0
      %1139 = vmatpush.msra.mxu0 0.0
      %1140 = vmatpush.msra.mxu0 %v1072
      %1141 = vmatpush.msra.mxu0 %v1071
      %1142 = vmatpush.msra.mxu0 %v1070
      %1143 = vmatpush.msra.mxu0 %v1069
      %1144 = vmatmul.f32.gmra.mxu0 %v830
      %v1145 = vpop.f32.mrf.mxu0
      %v1146 = vadd.f32 %v1126, %v1145
      %1147 = vdwg.mxu0
      %v1148 = vld [vmem:[%s14] sm:$0x1]
      %v1150 = vperm.slane %v1148, 0
      %v1152 = vadd.f32 %v1146, %v1150
      %v1153 = vtanh.pop %v1152
      %v1154 = vld [vmem:[%s15] sm:$0xff]
      %v1155 = vld [vmem:[%s15 + $0x8] sm:$0xff]
      %v1156 = vld [vmem:[%s15 + $0x10] sm:$0xff]
      %v1157 = vld [vmem:[%s15 + $0x18] sm:$0xff]
      %v1158 = vld [vmem:[%s16] sm:$0x1]
      %v1160 = vperm.slane %v1158, 0
      %v1163 = vsel %vm591, %v1153, 0
      %1165 = vmatpush.msra.mxu0 0.0
      %1166 = vmatpush.msra.mxu0 0.0
      %1167 = vmatpush.msra.mxu0 0.0
      %1168 = vmatpush.msra.mxu0 0.0
      %1169 = vmatpush.msra.mxu0 0.0
      %1170 = vmatpush.msra.mxu0 0.0
      %1171 = vmatpush.msra.mxu0 0.0
      %1172 = vmatpush.msra.mxu0 0.0
      %1173 = vmatpush.msra.mxu0 0.0
      %1174 = vmatpush.msra.mxu0 0.0
      %1175 = vmatpush.msra.mxu0 0.0
      %1176 = vmatpush.msra.mxu0 0.0
      %1177 = vmatpush.msra.mxu0 %v1157
      %1178 = vmatpush.msra.mxu0 %v1156
      %1179 = vmatpush.msra.mxu0 %v1155
      %1180 = vmatpush.msra.mxu0 %v1154
      %1181 = vmatmul.f32.gmra.mxu0 %v1163
      %v1182 = vpop.f32.mrf.mxu0
      %v1183 = vadd.f32 %v1160, %v1182
      %1184 = vdwg.mxu0
      %1185 = vst.msk [vmem:[%s568] sm:$0xff] %vm591, %v1183
      %p1186 = scmp.eq.s32.totalorder %s30, 8
      // Predicated region
      $region93: #{seq2seq_forward.3} parent=87 // pred_check
        %p1187 = pneg %p1186
      $region94: #{seq2seq_forward.3} parent=87 // pred_check_branch
        %1189 = sbr.rel (%p1187) target = $region96
      $region95: #{seq2seq_forward.3} parent=87 // pred_region
        %v1190 = vld [vmem:[#allocation2] sm:$0xff]
        %v1191 = vld [vmem:[#allocation2 + $0x8] sm:$0xff]
        %1192 = vst.msk [vmem:[%s18] sm:$0xff] %vm591, %v1190
        %1193 = vst.msk [vmem:[%s18 + $0x8] sm:$0xff] %vm591, %v1191
      $region96: #{seq2seq_forward.3} parent=87 // pred_fallthru
        _
      %p1194 = scmp.lt.s32.totalorder %s30, 8
      %s1195 = scalar_select %p1194, %s30, 8
      %s1196 = smul.addr %s1195, 8
      %s1197 = scalar_lea.vmem %s17, %s1196
      // Predicated region
      $region97: #{seq2seq_forward.3} parent=87 // pred_check
        %p1198 = pneg %p410
      $region98: #{seq2seq_forward.3} parent=87 // pred_check_branch
        %1200 = sbr.rel (%p1198) target = $region100
      $region99: #{seq2seq_forward.3} parent=87 // pred_region
        _
      $region100: #{seq2seq_forward.3} parent=87 // pred_fallthru
        _
      // Predicated region
      $region101: #{seq2seq_forward.3} parent=87 // pred_check
        %p1201 = pneg %p431
      $region102: #{seq2seq_forward.3} parent=87 // pred_check_branch
        %1203 = sbr.rel (%p1201) target = $region104
      $region103: #{seq2seq_forward.3} parent=87 // pred_region
        _
      $region104: #{seq2seq_forward.3} parent=87 // pred_fallthru
        _
      // Predicated region
      $region105: #{seq2seq_forward.3} parent=87 // pred_check
        %p1204 = pneg %p431
      $region106: #{seq2seq_forward.3} parent=87 // pred_check_branch
        %1206 = sbr.rel (%p1204) target = $region108
      $region107: #{seq2seq_forward.3} parent=87 // pred_region
        _
      $region108: #{seq2seq_forward.3} parent=87 // pred_fallthru
        _
    $region88: #{seq2seq_forward.3} parent=5 // pred_fallthru
      _
    %p1207 = scmp.le.s32.totalorder 2, %s25
    // Predicated region
    $region109: #{seq2seq_forward.3} parent=5 // pred_check
      %p1208 = pneg %p1207
    $region110: #{seq2seq_forward.3} parent=5 // pred_check_branch
      %1210 = sbr.rel (%p1208) target = $region112
    $region111: #{seq2seq_forward.3} parent=5 // pred_region
      %s1211 = ssub.s32 %s25, 2
      // Predicated region
      $region113: #{seq2seq_forward.3} parent=111 // pred_check
        %p1212 = pneg %p416
      $region114: #{seq2seq_forward.3} parent=111 // pred_check_branch
        %1214 = sbr.rel (%p1212) target = $region116
      $region115: #{seq2seq_forward.3} parent=111 // pred_region
        %p1215 = scmp.lt.s32.totalorder %s31, 8
        %s1216 = scalar_select %p1215, %s31, 8
        %s1217 = smul.addr %s1216, 8
        %s1218 = scalar_lea.vmem %s17, %s1217
      $region116: #{seq2seq_forward.3} parent=111 // pred_fallthru
        _
    $region112: #{seq2seq_forward.3} parent=5 // pred_fallthru
      _
  $region6: #{seq2seq_forward.3} parent=0 // loop_footer
    %s29 = sadd.s32 1, %s25
  $region7: #{seq2seq_forward.3} parent=0 // loop_footer_branch
    %24 = sbr.rel target = $region3
  $region8: #{seq2seq_forward.3} parent=0 // loop_exit
    _

</llo_original>
